<compile_context>
chip_gen: v7x
topology: tpu7x:2x2x1
jax: 0.10.0
libtpu: 0.0.40
codegen_flags: <defaults>
</compile_context>

<pallas_src>
import math
import jax
import jax.numpy as jnp
from jax import lax
from jax.experimental import pallas as pl
from jax.experimental.pallas import tpu as pltpu

# ----------------------- config (consistent with __init__) --------------------
NUM_TYPES = 5          # num_types
D_INPUT   = 32         # d_input (even, for the sin/cos positional emb)
D_HIDDEN  = 64         # d_hidden (FFN)
N_LAYERS  = 2
N_HEAD    = 2
D_QK      = 16
D_V       = 16
BATCH     = 2
SEQ       = 8
LN_EPS    = 1e-5
NEG_INF   = -1e9

BS    = BATCH * SEQ            # batch folded into rows
HDK   = N_HEAD * D_QK          # 32
HDV   = N_HEAD * D_V           # 32
QKV_W = 3 * HDK                # 96

assert D_INPUT % 2 == 0
assert D_QK == D_V

# ---- packed weight-blob layout (per layer), lane width W_LANES = 96 ----------
W_LANES = max(QKV_W, D_INPUT + D_HIDDEN, 3 * D_INPUT)      # 96
R_QKV = 0                        # rows [0, 32):  Wqkv (D, 3*H*DK)
R_OW1 = D_INPUT                  # rows [32, 64): cols[0:32]=Wo (H*DV, D), cols[32:96]=W1 (D, DH)
R_W2  = 2 * D_INPUT              # rows [64,128): cols[0:32]=W2 (DH, D)
R_VEC = 2 * D_INPUT + D_HIDDEN   # 128: vector rows:
#   row R_VEC+0: [ln_gain_attn | ln_bias_attn | b_o]
#   row R_VEC+1: [ln_gain_ffn  | ln_bias_ffn  | b2 ]
#   row R_VEC+2: [b1 (DH lanes)]
R_TOT = R_VEC + 8                # 136 (sublane-aligned)


# ============================ fused Pallas kernel =============================
def _encoder_kernel(xin_ref, pos_ref, w_ref, o_ref):
    """Whole Encoder forward in one grid step (batch folded into rows).

    xin_ref: (B*S, D+2)     lanes [0:D]=event emb, [D]=event_time, [D+1]=non_pad_mask
    pos_ref: (B*S+1, D)     rows [0:B*S]=arc (lane-duplicated, batch-tiled), row B*S=Wt dup
    w_ref:   (L, 136, 96)   packed weights/biases/LN (layout above)
    o_ref:   (B*S, D)
    """
    f32 = jnp.float32
    xin = xin_ref[...]                              # (BS, D+2)
    emb = xin[:, 0:D_INPUT]                         # (BS, D)
    t   = xin[:, D_INPUT:D_INPUT + 1]               # (BS, 1)
    npm = xin[:, D_INPUT + 1:D_INPUT + 2]           # (BS, 1)

    # ---- BiasedPositionalEmbedding: pe[...,2i]=sin(arc_i + Wt_i*t),
    #      pe[...,2i+1]=cos(...)  (arc/Wt arrive lane-duplicated; parity select)
    arc = pos_ref[0:BS, :]                          # (BS, D)
    wt  = pos_ref[BS:BS + 1, :]                     # (1, D)
    ang = arc + t * wt                              # (BS, D)
    lane = lax.broadcasted_iota(jnp.int32, (BS, D_INPUT), 1)
    pe = jnp.where((lane & 1) == 0, jnp.sin(ang), jnp.cos(ang))
    x = pe + emb                                    # mingled embedding (BS, D)

    # ---- attention mask (built once, batch folded into rows):
    #      masked = cross-batch OR key-after-query OR padded-query
    #      (matches the module: keypad mask is repeat('b s -> b s s1'), i.e. per query)
    row = lax.broadcasted_iota(jnp.int32, (BS, BS), 0)
    col = lax.broadcasted_iota(jnp.int32, (BS, BS), 1)
    inv_s = 1.0 / SEQ                               # batch id via float floor (no int div)
    qb = jnp.floor((row.astype(f32) + 0.5) * inv_s)
    kb = jnp.floor((col.astype(f32) + 0.5) * inv_s)
    mask = (col > row) | (qb != kb) | (npm < 0.5)   # (BS, BS)

    scale = 1.0 / math.sqrt(D_QK)

    def layer_norm(v, g, b):
        mu = jnp.mean(v, axis=-1, keepdims=True)
        var = jnp.mean((v - mu) ** 2, axis=-1, keepdims=True)
        return (v - mu) * lax.rsqrt(var + LN_EPS) * g + b

    for l in range(N_LAYERS):                       # static unroll over layers
        w_qkv = w_ref[l, R_QKV:R_QKV + D_INPUT, :]                              # (32, 96)
        w_o   = w_ref[l, R_OW1:R_OW1 + HDV, 0:D_INPUT]                          # (32, 32)
        w_1   = w_ref[l, R_OW1:R_OW1 + D_INPUT, D_INPUT:D_INPUT + D_HIDDEN]     # (32, 64)
        w_2   = w_ref[l, R_W2:R_W2 + D_HIDDEN, 0:D_INPUT]                       # (64, 32)
        ln_ga = w_ref[l, R_VEC + 0:R_VEC + 1, 0:D_INPUT]                        # (1, 32)
        ln_ba = w_ref[l, R_VEC + 0:R_VEC + 1, D_INPUT:2 * D_INPUT]
        b_o   = w_ref[l, R_VEC + 0:R_VEC + 1, 2 * D_INPUT:3 * D_INPUT]
        ln_gf = w_ref[l, R_VEC + 1:R_VEC + 2, 0:D_INPUT]
        ln_bf = w_ref[l, R_VEC + 1:R_VEC + 2, D_INPUT:2 * D_INPUT]
        b_2   = w_ref[l, R_VEC + 1:R_VEC + 2, 2 * D_INPUT:3 * D_INPUT]
        b_1   = w_ref[l, R_VEC + 2:R_VEC + 3, 0:D_HIDDEN]                       # (1, 64)

        # ---- pre-norm multi-head self-attention (eval: dropout = identity) ----
        xn = layer_norm(x, ln_ga, ln_ba)                                        # (BS, D)
        qkv = jnp.dot(xn, w_qkv, preferred_element_type=f32)                    # (BS, 96)
        ctx_heads = []
        for h in range(N_HEAD):                     # static unroll over heads
            qh = qkv[:, h * D_QK:(h + 1) * D_QK]                                # (BS, dk)
            kh = qkv[:, HDK + h * D_QK:HDK + (h + 1) * D_QK]                    # (BS, dk)
            vh = qkv[:, 2 * HDK + h * D_V:2 * HDK + (h + 1) * D_V]              # (BS, dv)
            s = jnp.einsum('qd,kd->qk', qh, kh,
                           preferred_element_type=f32) * scale                  # (BS, BS)
            s = jnp.where(mask, NEG_INF, s)
            s = s - jnp.max(s, axis=-1, keepdims=True)
            p = jnp.exp(s)
            p = p / jnp.sum(p, axis=-1, keepdims=True)                          # exact softmax
            ctx_heads.append(jnp.dot(p, vh, preferred_element_type=f32))        # (BS, dv)
        ctx = jnp.concatenate(ctx_heads, axis=-1)                               # (BS, H*dv)
        attn = jnp.dot(ctx, w_o, preferred_element_type=f32) + b_o + x          # bias+residual
        attn = attn * npm                                                       # non_pad_mask

        # ---- position-wise feed-forward (pre-norm, ReLU, residual) ----
        yn = layer_norm(attn, ln_gf, ln_bf)
        h1 = jnp.maximum(jnp.dot(yn, w_1, preferred_element_type=f32) + b_1, 0.0)
        y2 = jnp.dot(h1, w_2, preferred_element_type=f32) + b_2
        x = (attn + y2) * npm                                                   # residual+mask

    o_ref[...] = x


# ============================ packing + wrapper ===============================
def pack_weight_blob(p):
    """Pack all per-layer weights/biases/LN params into one (L, 136, 96) blob."""
    blob = jnp.zeros((N_LAYERS, R_TOT, W_LANES), jnp.float32)
    blob = blob.at[:, R_QKV:R_QKV + D_INPUT, 0:QKV_W].set(p["w_qkv"])
    blob = blob.at[:, R_OW1:R_OW1 + HDV, 0:D_INPUT].set(p["w_o"])
    blob = blob.at[:, R_OW1:R_OW1 + D_INPUT, D_INPUT:D_INPUT + D_HIDDEN].set(p["w1"])
    blob = blob.at[:, R_W2:R_W2 + D_HIDDEN, 0:D_INPUT].set(p["w2"])
    blob = blob.at[:, R_VEC + 0, 0:D_INPUT].set(p["ln_g"][:, 0])
    blob = blob.at[:, R_VEC + 0, D_INPUT:2 * D_INPUT].set(p["ln_b"][:, 0])
    blob = blob.at[:, R_VEC + 0, 2 * D_INPUT:3 * D_INPUT].set(p["b_o"])
    blob = blob.at[:, R_VEC + 1, 0:D_INPUT].set(p["ln_g"][:, 1])
    blob = blob.at[:, R_VEC + 1, D_INPUT:2 * D_INPUT].set(p["ln_b"][:, 1])
    blob = blob.at[:, R_VEC + 1, 2 * D_INPUT:3 * D_INPUT].set(p["b2"])
    blob = blob.at[:, R_VEC + 2, 0:D_HIDDEN].set(p["b1"])
    return blob


@jax.jit
def encoder_forward(params, event_type, event_time, non_pad_mask):
    B, S = event_type.shape
    assert (B, S) == (BATCH, SEQ)

    # event embedding lookup (data-dependent gather stays as wrapper glue)
    events_emb = params["event_emb"][event_type].astype(jnp.float32)      # (B,S,D)

    # per-token data packed into ONE lane-packed input: [emb | time | npm]
    xin = jnp.concatenate(
        [events_emb.reshape(BS, D_INPUT),
         event_time.astype(jnp.float32).reshape(BS, 1),
         non_pad_mask.astype(jnp.float32).reshape(BS, 1)], axis=-1)       # (BS, D+2)

    # positional-embedding params: arc_i = pos*div_term_i duplicated onto lanes
    # (2i, 2i+1) and tiled over the folded batch; Wt duplicated the same way.
    position = jnp.arange(S, dtype=jnp.float32)[:, None]
    arc_half = position * params["div_term"][None, :]                     # (S, D/2)
    arc = jnp.repeat(arc_half, 2, axis=-1)                                # (S, D)
    wt  = jnp.repeat(params["pos_wt"], 2, axis=-1)                        # (1, D)
    pos = jnp.concatenate([jnp.tile(arc, (B, 1)), wt], axis=0)            # (BS+1, D)

    wblob = pack_weight_blob(params)                                      # (L,136,96)

    flops = int(2 * N_LAYERS * (BS * D_INPUT * QKV_W
                                + N_HEAD * BS * BS * (D_QK + D_V)
                                + BS * HDV * D_INPUT
                                + 2 * BS * D_INPUT * D_HIDDEN))
    transcendentals = int(2 * BS * D_INPUT + N_LAYERS * N_HEAD * BS * BS
                          + 4 * N_LAYERS * BS)
    bytes_accessed = int(4 * (xin.size + pos.size + wblob.size + BS * D_INPUT))

    out2d = pl.pallas_call(
        _encoder_kernel,
        out_shape=jax.ShapeDtypeStruct((BS, D_INPUT), jnp.float32),
        grid=(1,),
        in_specs=[
            pl.BlockSpec((BS, D_INPUT + 2), lambda i: (0, 0)),
            pl.BlockSpec((BS + 1, D_INPUT), lambda i: (0, 0)),
            pl.BlockSpec((N_LAYERS, R_TOT, W_LANES), lambda i: (0, 0, 0)),
        ],
        out_specs=pl.BlockSpec((BS, D_INPUT), lambda i: (0, 0)),
        compiler_params=pltpu.CompilerParams(dimension_semantics=("arbitrary",)),
        cost_estimate=pl.CostEstimate(flops=flops,
                                      transcendentals=transcendentals,
                                      bytes_accessed=bytes_accessed),
    )(xin, pos, wblob)
    return out2d.reshape(B, S, D_INPUT)


# ============================ pure-JAX reference ==============================
def encoder_reference(params, event_type, event_time, non_pad_mask):
    """Straightforward JAX transcription of the PyTorch Encoder.forward."""
    HI = lax.Precision.HIGHEST
    B, S = event_type.shape
    emb = params["event_emb"][event_type]                                 # (B,S,D)
    t = event_time.astype(jnp.float32)[..., None]                         # (B,S,1)
    npm = non_pad_mask.astype(jnp.float32)[..., None]                     # (B,S,1)

    position = jnp.arange(S, dtype=jnp.float32)[:, None]
    arc = position * params["div_term"][None, :]                          # (S, D/2)
    ang = arc[None] + t * params["pos_wt"]                                # (B,S,D/2)
    pe = jnp.zeros((B, S, D_INPUT), jnp.float32)
    pe = pe.at[..., 0::2].set(jnp.sin(ang))
    pe = pe.at[..., 1::2].set(jnp.cos(ang))
    x = pe + emb

    # mask exactly as Encoder.forward builds it: per-query pad + causal
    keypad = (1.0 - non_pad_mask.astype(jnp.float32))[:, :, None]         # (B,S,1)
    subseq = (jnp.arange(S)[None, :] > jnp.arange(S)[:, None]).astype(jnp.float32)
    mask = (keypad + subseq[None]) > 0                                    # (B,S,S)

    scale = 1.0 / math.sqrt(D_QK)

    def ln(v, g, b):
        mu = v.mean(-1, keepdims=True)
        var = ((v - mu) ** 2).mean(-1, keepdims=True)
        return (v - mu) / jnp.sqrt(var + LN_EPS) * g + b

    for l in range(N_LAYERS):
        xn = ln(x, params["ln_g"][l, 0], params["ln_b"][l, 0])
        qkv = jnp.einsum('bsd,df->bsf', xn, params["w_qkv"][l], precision=HI)
        outs = []
        for h in range(N_HEAD):
            q = qkv[..., h * D_QK:(h + 1) * D_QK]
            k = qkv[..., HDK + h * D_QK:HDK + (h + 1) * D_QK]
            v = qkv[..., 2 * HDK + h * D_V:2 * HDK + (h + 1) * D_V]
            s = jnp.einsum('bqd,bkd->bqk', q, k, precision=HI) * scale
            s = jnp.where(mask, NEG_INF, s)
            p = jax.nn.softmax(s, axis=-1)
            outs.append(jnp.einsum('bqk,bkd->bqd', p, v, precision=HI))
        ctx = jnp.concatenate(outs, axis=-1)
        attn = jnp.einsum('bsd,de->bse', ctx, params["w_o"][l], precision=HI)
        attn = (attn + params["b_o"][l] + x) * npm
        yn = ln(attn, params["ln_g"][l, 1], params["ln_b"][l, 1])
        h1 = jnp.maximum(
            jnp.einsum('bsd,dh->bsh', yn, params["w1"][l], precision=HI)
            + params["b1"][l], 0.0)
        y2 = jnp.einsum('bsh,hd->bsd', h1, params["w2"][l], precision=HI) + params["b2"][l]
        x = (attn + y2) * npm
    return x


# ============================ parameters ======================================
def init_params(key):
    ks = iter(jax.random.split(key, 8))

    def nrm(shape, scale=0.05):
        return scale * jax.random.normal(next(ks), shape, dtype=jnp.float32)

    # nn.Embedding(num_types + 1, d_input, padding_idx=num_types)
    emb = nrm((NUM_TYPES + 1, D_INPUT), 0.1)
    emb = emb.at[NUM_TYPES].set(0.0)

    # BiasedPositionalEmbedding buffers + Wt (Linear(1, d//2, bias=False))
    div_term = jnp.exp(jnp.arange(0, D_INPUT, 2, dtype=jnp.float32)
                       * -(math.log(10000.0) / D_INPUT))                  # (D/2,)
    pos_wt = nrm((1, D_INPUT // 2), 0.1)

    L = N_LAYERS
    return dict(
        event_emb=emb, div_term=div_term, pos_wt=pos_wt,
        # merged lane-dense projections, (in_features, out_features):
        # w_qkv columns = [Q_h0 | Q_h1 | K_h0 | K_h1 | V_h0 | V_h1]
        w_qkv=nrm((L, D_INPUT, QKV_W)),
        w_o=nrm((L, HDV, D_INPUT)),
        b_o=jnp.zeros((L, D_INPUT), jnp.float32),
        ln_g=jnp.ones((L, 2, D_INPUT), jnp.float32),
        ln_b=jnp.zeros((L, 2, D_INPUT), jnp.float32),
        w1=nrm((L, D_INPUT, D_HIDDEN)),
        b1=jnp.zeros((L, D_HIDDEN), jnp.float32),
        w2=nrm((L, D_HIDDEN, D_INPUT)),
        b2=jnp.zeros((L, D_INPUT), jnp.float32),
    )


# ==================================== main ====================================
if __name__ == "__main__":
    key = jax.random.PRNGKey(0)
    kp, kt, ktime = jax.random.split(key, 3)

    params = init_params(kp)

    # event types in [0, NUM_TYPES); pad tail of second sequence with padding_idx
    event_type = jax.random.randint(kt, (BATCH, SEQ), 0, NUM_TYPES)
    non_pad_mask = jnp.ones((BATCH, SEQ), jnp.float32)
    non_pad_mask = non_pad_mask.at[1, SEQ - 2:].set(0.0)
    event_type = jnp.where(non_pad_mask > 0, event_type, NUM_TYPES).astype(jnp.int32)

    # positive, increasing-ish event time intervals
    event_time = jnp.cumsum(
        jnp.abs(jax.random.normal(ktime, (BATCH, SEQ), jnp.float32)), axis=-1)
    event_time = event_time * non_pad_mask

    out = encoder_forward(params, event_type, event_time, non_pad_mask)
    out = jax.block_until_ready(out)

    ref = encoder_reference(params, event_type, event_time, non_pad_mask)
    max_err = float(jnp.max(jnp.abs(out - ref)))

    assert out.shape == (BATCH, SEQ, D_INPUT)
    assert bool(jnp.all(jnp.isfinite(out)))
    # padded positions must be exactly zero (non_pad_mask multiply in the kernel)
    assert bool(jnp.all(out[1, SEQ - 2:] == 0.0))
    assert max_err < 5e-3, f"kernel vs reference max abs err {max_err}"
    print("KERNEL_OK")
</pallas_src>

<mosaic_0001>
module attributes {stable_mosaic.version = 11 : i64} {
  func.func @_encoder_kernel(%arg0: i32, %arg1: memref<16x34xf32, #tpu.memory_space<vmem>>, %arg2: memref<17x32xf32, #tpu.memory_space<vmem>>, %arg3: memref<2x136x96xf32, #tpu.memory_space<vmem>>, %arg4: memref<16x32xf32, #tpu.memory_space<vmem>>) attributes {dimension_semantics = [#tpu.dimension_semantics<arbitrary>], iteration_bounds = array<i64: 1>, scalar_prefetch = 0 : i64, scratch_operands = 0 : i64, tpu.core_type = #tpu.core_type<tc>, window_params = [{pipeline_mode = #tpu.pipeline_mode<synchronous>, transform_indices = @transform_0, window_bounds = array<i64: 16, 34>}, {pipeline_mode = #tpu.pipeline_mode<synchronous>, transform_indices = @transform_1, window_bounds = array<i64: 17, 32>}, {pipeline_mode = #tpu.pipeline_mode<synchronous>, transform_indices = @transform_2, window_bounds = array<i64: 2, 136, 96>}, {pipeline_mode = #tpu.pipeline_mode<synchronous>, transform_indices = @transform_3, window_bounds = array<i64: 16, 32>}]} {
    %c0 = arith.constant 0 : index
    %c0_0 = arith.constant 0 : index
    %0 = vector.load %arg1[%c0, %c0_0] : memref<16x34xf32, #tpu.memory_space<vmem>>, vector<16x34xf32>
    %1 = vector.extract_strided_slice %0 {offsets = [0, 0], sizes = [16, 32], strides = [1, 1]} : vector<16x34xf32> to vector<16x32xf32>
    %2 = vector.extract_strided_slice %0 {offsets = [0, 32], sizes = [16, 1], strides = [1, 1]} : vector<16x34xf32> to vector<16x1xf32>
    %3 = vector.extract_strided_slice %0 {offsets = [0, 33], sizes = [16, 1], strides = [1, 1]} : vector<16x34xf32> to vector<16x1xf32>
    %c0_1 = arith.constant 0 : index
    %c0_2 = arith.constant 0 : index
    %4 = vector.load %arg2[%c0_1, %c0_2] : memref<17x32xf32, #tpu.memory_space<vmem>>, vector<16x32xf32>
    %c16 = arith.constant 16 : index
    %c0_3 = arith.constant 0 : index
    %5 = vector.load %arg2[%c16, %c0_3] : memref<17x32xf32, #tpu.memory_space<vmem>>, vector<1x32xf32>
    %6 = vector.broadcast %2 : vector<16x1xf32> to vector<16x32xf32>
    %7 = vector.broadcast %5 : vector<1x32xf32> to vector<16x32xf32>
    %8 = arith.mulf %6, %7 : vector<16x32xf32>
    %9 = arith.addf %4, %8 : vector<16x32xf32>
    %10 = tpu.iota {dimensions = array<i32: 1>} : vector<16x32xi32>
    %c1_i32 = arith.constant 1 : i32
    %11 = vector.broadcast %c1_i32 : i32 to vector<16x32xi32>
    %12 = arith.andi %10, %11 : vector<16x32xi32>
    %c0_i32 = arith.constant 0 : i32
    %13 = vector.broadcast %c0_i32 : i32 to vector<16x32xi32>
    %14 = arith.cmpi eq, %12, %13 : vector<16x32xi32>
    %15 = math.sin %9 : vector<16x32xf32>
    %16 = math.cos %9 : vector<16x32xf32>
    %17 = arith.select %14, %15, %16 : vector<16x32xi1>, vector<16x32xf32>
    %18 = arith.addf %17, %1 : vector<16x32xf32>
    %19 = tpu.iota {dimensions = array<i32: 0>} : vector<16x16xi32>
    %20 = tpu.iota {dimensions = array<i32: 1>} : vector<16x16xi32>
    %21 = arith.sitofp %19 : vector<16x16xi32> to vector<16x16xf32>
    %cst = arith.constant 5.000000e-01 : f32
    %22 = vector.broadcast %cst : f32 to vector<16x16xf32>
    %23 = arith.addf %21, %22 : vector<16x16xf32>
    %cst_4 = arith.constant 1.250000e-01 : f32
    %24 = vector.broadcast %cst_4 : f32 to vector<16x16xf32>
    %25 = arith.mulf %23, %24 : vector<16x16xf32>
    %26 = math.floor %25 : vector<16x16xf32>
    %27 = arith.sitofp %20 : vector<16x16xi32> to vector<16x16xf32>
    %cst_5 = arith.constant 5.000000e-01 : f32
    %28 = vector.broadcast %cst_5 : f32 to vector<16x16xf32>
    %29 = arith.addf %27, %28 : vector<16x16xf32>
    %cst_6 = arith.constant 1.250000e-01 : f32
    %30 = vector.broadcast %cst_6 : f32 to vector<16x16xf32>
    %31 = arith.mulf %29, %30 : vector<16x16xf32>
    %32 = math.floor %31 : vector<16x16xf32>
    %33 = arith.cmpi sgt, %20, %19 : vector<16x16xi32>
    %34 = arith.cmpf one, %26, %32 : vector<16x16xf32>
    %35 = arith.ori %33, %34 : vector<16x16xi1>
    %cst_7 = arith.constant 5.000000e-01 : f32
    %36 = vector.broadcast %cst_7 : f32 to vector<16x1xf32>
    %37 = arith.cmpf olt, %3, %36 : vector<16x1xf32>
    %38 = vector.broadcast %37 : vector<16x1xi1> to vector<16x16xi1>
    %39 = arith.ori %35, %38 : vector<16x16xi1>
    %c0_8 = arith.constant 0 : index
    %c0_9 = arith.constant 0 : index
    %c0_10 = arith.constant 0 : index
    %40 = vector.load %arg3[%c0_8, %c0_9, %c0_10] : memref<2x136x96xf32, #tpu.memory_space<vmem>>, vector<1x32x96xf32>
    %41 = vector.shape_cast %40 : vector<1x32x96xf32> to vector<32x96xf32>
    %c0_11 = arith.constant 0 : index
    %c32 = arith.constant 32 : index
    %c0_12 = arith.constant 0 : index
    %42 = vector.load %arg3[%c0_11, %c32, %c0_12] : memref<2x136x96xf32, #tpu.memory_space<vmem>>, vector<1x32x32xf32>
    %43 = vector.shape_cast %42 : vector<1x32x32xf32> to vector<32x32xf32>
    %c0_13 = arith.constant 0 : index
    %c32_14 = arith.constant 32 : index
    %c32_15 = arith.constant 32 : index
    %44 = vector.load %arg3[%c0_13, %c32_14, %c32_15] : memref<2x136x96xf32, #tpu.memory_space<vmem>>, vector<1x32x64xf32>
    %45 = vector.shape_cast %44 : vector<1x32x64xf32> to vector<32x64xf32>
    %c0_16 = arith.constant 0 : index
    %c64 = arith.constant 64 : index
    %c0_17 = arith.constant 0 : index
    %46 = vector.load %arg3[%c0_16, %c64, %c0_17] : memref<2x136x96xf32, #tpu.memory_space<vmem>>, vector<1x64x32xf32>
    %47 = vector.shape_cast %46 : vector<1x64x32xf32> to vector<64x32xf32>
    %c0_18 = arith.constant 0 : index
    %c128 = arith.constant 128 : index
    %c0_19 = arith.constant 0 : index
    %48 = vector.load %arg3[%c0_18, %c128, %c0_19] : memref<2x136x96xf32, #tpu.memory_space<vmem>>, vector<1x1x32xf32>
    %49 = vector.shape_cast %48 : vector<1x1x32xf32> to vector<1x32xf32>
    %c0_20 = arith.constant 0 : index
    %c128_21 = arith.constant 128 : index
    %c32_22 = arith.constant 32 : index
    %50 = vector.load %arg3[%c0_20, %c128_21, %c32_22] : memref<2x136x96xf32, #tpu.memory_space<vmem>>, vector<1x1x32xf32>
    %51 = vector.shape_cast %50 : vector<1x1x32xf32> to vector<1x32xf32>
    %c0_23 = arith.constant 0 : index
    %c128_24 = arith.constant 128 : index
    %c64_25 = arith.constant 64 : index
    %52 = vector.load %arg3[%c0_23, %c128_24, %c64_25] : memref<2x136x96xf32, #tpu.memory_space<vmem>>, vector<1x1x32xf32>
    %53 = vector.shape_cast %52 : vector<1x1x32xf32> to vector<1x32xf32>
    %c0_26 = arith.constant 0 : index
    %c129 = arith.constant 129 : index
    %c0_27 = arith.constant 0 : index
    %54 = vector.load %arg3[%c0_26, %c129, %c0_27] : memref<2x136x96xf32, #tpu.memory_space<vmem>>, vector<1x1x32xf32>
    %55 = vector.shape_cast %54 : vector<1x1x32xf32> to vector<1x32xf32>
    %c0_28 = arith.constant 0 : index
    %c129_29 = arith.constant 129 : index
    %c32_30 = arith.constant 32 : index
    %56 = vector.load %arg3[%c0_28, %c129_29, %c32_30] : memref<2x136x96xf32, #tpu.memory_space<vmem>>, vector<1x1x32xf32>
    %57 = vector.shape_cast %56 : vector<1x1x32xf32> to vector<1x32xf32>
    %c0_31 = arith.constant 0 : index
    %c129_32 = arith.constant 129 : index
    %c64_33 = arith.constant 64 : index
    %58 = vector.load %arg3[%c0_31, %c129_32, %c64_33] : memref<2x136x96xf32, #tpu.memory_space<vmem>>, vector<1x1x32xf32>
    %59 = vector.shape_cast %58 : vector<1x1x32xf32> to vector<1x32xf32>
    %c0_34 = arith.constant 0 : index
    %c130 = arith.constant 130 : index
    %c0_35 = arith.constant 0 : index
    %60 = vector.load %arg3[%c0_34, %c130, %c0_35] : memref<2x136x96xf32, #tpu.memory_space<vmem>>, vector<1x1x64xf32>
    %61 = vector.shape_cast %60 : vector<1x1x64xf32> to vector<1x64xf32>
    %cst_36 = arith.constant dense<0.000000e+00> : vector<16xf32>
    %62 = vector.multi_reduction <add>, %18, %cst_36 [1] : vector<16x32xf32> to vector<16xf32>
    %63 = vector.shape_cast %62 : vector<16xf32> to vector<16x1xf32>
    %cst_37 = arith.constant 3.200000e+01 : f32
    %64 = vector.broadcast %cst_37 : f32 to vector<16x1xf32>
    %65 = arith.divf %63, %64 : vector<16x1xf32>
    %66 = vector.broadcast %65 : vector<16x1xf32> to vector<16x32xf32>
    %67 = arith.subf %18, %66 : vector<16x32xf32>
    %68 = arith.mulf %67, %67 : vector<16x32xf32>
    %cst_38 = arith.constant dense<0.000000e+00> : vector<16xf32>
    %69 = vector.multi_reduction <add>, %68, %cst_38 [1] : vector<16x32xf32> to vector<16xf32>
    %70 = vector.shape_cast %69 : vector<16xf32> to vector<16x1xf32>
    %cst_39 = arith.constant 3.200000e+01 : f32
    %71 = vector.broadcast %cst_39 : f32 to vector<16x1xf32>
    %72 = arith.divf %70, %71 : vector<16x1xf32>
    %73 = vector.broadcast %65 : vector<16x1xf32> to vector<16x32xf32>
    %74 = arith.subf %18, %73 : vector<16x32xf32>
    %cst_40 = arith.constant 9.99999974E-6 : f32
    %75 = vector.broadcast %cst_40 : f32 to vector<16x1xf32>
    %76 = arith.addf %72, %75 : vector<16x1xf32>
    %77 = math.rsqrt %76 : vector<16x1xf32>
    %78 = vector.broadcast %77 : vector<16x1xf32> to vector<16x32xf32>
    %79 = arith.mulf %74, %78 : vector<16x32xf32>
    %80 = vector.broadcast %49 : vector<1x32xf32> to vector<16x32xf32>
    %81 = arith.mulf %79, %80 : vector<16x32xf32>
    %82 = vector.broadcast %51 : vector<1x32xf32> to vector<16x32xf32>
    %83 = arith.addf %81, %82 : vector<16x32xf32>
    %cst_41 = arith.constant dense<0.000000e+00> : vector<16x96xf32>
    %84 = tpu.matmul %83, %41, %cst_41 {dimension_numbers = #tpu.dot_dimension_numbers<[1], [0], [0], [1], [0, 0, 1, 1], [], []>} : vector<16x32xf32>, vector<32x96xf32>, vector<16x96xf32> -> vector<16x96xf32>
    %85 = vector.extract_strided_slice %84 {offsets = [0, 0], sizes = [16, 16], strides = [1, 1]} : vector<16x96xf32> to vector<16x16xf32>
    %86 = vector.extract_strided_slice %84 {offsets = [0, 32], sizes = [16, 16], strides = [1, 1]} : vector<16x96xf32> to vector<16x16xf32>
    %87 = vector.extract_strided_slice %84 {offsets = [0, 64], sizes = [16, 16], strides = [1, 1]} : vector<16x96xf32> to vector<16x16xf32>
    "tpu.trace_start"() <{level = 10 : i32, message = "qd,kd->qk"}> : () -> ()
    %cst_42 = arith.constant dense<0.000000e+00> : vector<16x16xf32>
    %88 = tpu.matmul %85, %86, %cst_42 {dimension_numbers = #tpu.dot_dimension_numbers<[1], [1], [0], [0], [0, 0, 1, 0], [], []>} : vector<16x16xf32>, vector<16x16xf32>, vector<16x16xf32> -> vector<16x16xf32>
    "tpu.trace_stop"() : () -> ()
    %cst_43 = arith.constant 2.500000e-01 : f32
    %89 = vector.broadcast %cst_43 : f32 to vector<16x16xf32>
    %90 = arith.mulf %88, %89 : vector<16x16xf32>
    %cst_44 = arith.constant -1.000000e+09 : f32
    %91 = vector.broadcast %cst_44 : f32 to vector<16x16xf32>
    %92 = arith.select %39, %91, %90 : vector<16x16xi1>, vector<16x16xf32>
    %cst_45 = arith.constant dense<0xFF800000> : vector<16xf32>
    %93 = vector.multi_reduction <maximumf>, %92, %cst_45 [1] : vector<16x16xf32> to vector<16xf32>
    %94 = vector.shape_cast %93 : vector<16xf32> to vector<16x1xf32>
    %95 = vector.broadcast %94 : vector<16x1xf32> to vector<16x16xf32>
    %96 = arith.subf %92, %95 : vector<16x16xf32>
    %97 = math.exp %96 : vector<16x16xf32>
    %cst_46 = arith.constant dense<0.000000e+00> : vector<16xf32>
    %98 = vector.multi_reduction <add>, %97, %cst_46 [1] : vector<16x16xf32> to vector<16xf32>
    %99 = vector.shape_cast %98 : vector<16xf32> to vector<16x1xf32>
    %100 = vector.broadcast %99 : vector<16x1xf32> to vector<16x16xf32>
    %101 = arith.divf %97, %100 : vector<16x16xf32>
    %cst_47 = arith.constant dense<0.000000e+00> : vector<16x16xf32>
    %102 = tpu.matmul %101, %87, %cst_47 {dimension_numbers = #tpu.dot_dimension_numbers<[1], [0], [0], [1], [0, 0, 1, 1], [], []>} : vector<16x16xf32>, vector<16x16xf32>, vector<16x16xf32> -> vector<16x16xf32>
    %103 = vector.extract_strided_slice %84 {offsets = [0, 16], sizes = [16, 16], strides = [1, 1]} : vector<16x96xf32> to vector<16x16xf32>
    %104 = vector.extract_strided_slice %84 {offsets = [0, 48], sizes = [16, 16], strides = [1, 1]} : vector<16x96xf32> to vector<16x16xf32>
    %105 = vector.extract_strided_slice %84 {offsets = [0, 80], sizes = [16, 16], strides = [1, 1]} : vector<16x96xf32> to vector<16x16xf32>
    "tpu.trace_start"() <{level = 10 : i32, message = "qd,kd->qk"}> : () -> ()
    %cst_48 = arith.constant dense<0.000000e+00> : vector<16x16xf32>
    %106 = tpu.matmul %103, %104, %cst_48 {dimension_numbers = #tpu.dot_dimension_numbers<[1], [1], [0], [0], [0, 0, 1, 0], [], []>} : vector<16x16xf32>, vector<16x16xf32>, vector<16x16xf32> -> vector<16x16xf32>
    "tpu.trace_stop"() : () -> ()
    %cst_49 = arith.constant 2.500000e-01 : f32
    %107 = vector.broadcast %cst_49 : f32 to vector<16x16xf32>
    %108 = arith.mulf %106, %107 : vector<16x16xf32>
    %cst_50 = arith.constant -1.000000e+09 : f32
    %109 = vector.broadcast %cst_50 : f32 to vector<16x16xf32>
    %110 = arith.select %39, %109, %108 : vector<16x16xi1>, vector<16x16xf32>
    %cst_51 = arith.constant dense<0xFF800000> : vector<16xf32>
    %111 = vector.multi_reduction <maximumf>, %110, %cst_51 [1] : vector<16x16xf32> to vector<16xf32>
    %112 = vector.shape_cast %111 : vector<16xf32> to vector<16x1xf32>
    %113 = vector.broadcast %112 : vector<16x1xf32> to vector<16x16xf32>
    %114 = arith.subf %110, %113 : vector<16x16xf32>
    %115 = math.exp %114 : vector<16x16xf32>
    %cst_52 = arith.constant dense<0.000000e+00> : vector<16xf32>
    %116 = vector.multi_reduction <add>, %115, %cst_52 [1] : vector<16x16xf32> to vector<16xf32>
    %117 = vector.shape_cast %116 : vector<16xf32> to vector<16x1xf32>
    %118 = vector.broadcast %117 : vector<16x1xf32> to vector<16x16xf32>
    %119 = arith.divf %115, %118 : vector<16x16xf32>
    %cst_53 = arith.constant dense<0.000000e+00> : vector<16x16xf32>
    %120 = tpu.matmul %119, %105, %cst_53 {dimension_numbers = #tpu.dot_dimension_numbers<[1], [0], [0], [1], [0, 0, 1, 1], [], []>} : vector<16x16xf32>, vector<16x16xf32>, vector<16x16xf32> -> vector<16x16xf32>
    %121 = tpu.concatenate %102, %120 in 1 : vector<16x16xf32>, vector<16x16xf32> -> vector<16x32xf32>
    %cst_54 = arith.constant dense<0.000000e+00> : vector<16x32xf32>
    %122 = tpu.matmul %121, %43, %cst_54 {dimension_numbers = #tpu.dot_dimension_numbers<[1], [0], [0], [1], [0, 0, 1, 1], [], []>} : vector<16x32xf32>, vector<32x32xf32>, vector<16x32xf32> -> vector<16x32xf32>
    %123 = vector.broadcast %53 : vector<1x32xf32> to vector<16x32xf32>
    %124 = arith.addf %122, %123 : vector<16x32xf32>
    %125 = arith.addf %124, %18 : vector<16x32xf32>
    %126 = vector.broadcast %3 : vector<16x1xf32> to vector<16x32xf32>
    %127 = arith.mulf %125, %126 : vector<16x32xf32>
    %cst_55 = arith.constant dense<0.000000e+00> : vector<16xf32>
    %128 = vector.multi_reduction <add>, %127, %cst_55 [1] : vector<16x32xf32> to vector<16xf32>
    %129 = vector.shape_cast %128 : vector<16xf32> to vector<16x1xf32>
    %cst_56 = arith.constant 3.200000e+01 : f32
    %130 = vector.broadcast %cst_56 : f32 to vector<16x1xf32>
    %131 = arith.divf %129, %130 : vector<16x1xf32>
    %132 = vector.broadcast %131 : vector<16x1xf32> to vector<16x32xf32>
    %133 = arith.subf %127, %132 : vector<16x32xf32>
    %134 = arith.mulf %133, %133 : vector<16x32xf32>
    %cst_57 = arith.constant dense<0.000000e+00> : vector<16xf32>
    %135 = vector.multi_reduction <add>, %134, %cst_57 [1] : vector<16x32xf32> to vector<16xf32>
    %136 = vector.shape_cast %135 : vector<16xf32> to vector<16x1xf32>
    %cst_58 = arith.constant 3.200000e+01 : f32
    %137 = vector.broadcast %cst_58 : f32 to vector<16x1xf32>
    %138 = arith.divf %136, %137 : vector<16x1xf32>
    %139 = vector.broadcast %131 : vector<16x1xf32> to vector<16x32xf32>
    %140 = arith.subf %127, %139 : vector<16x32xf32>
    %cst_59 = arith.constant 9.99999974E-6 : f32
    %141 = vector.broadcast %cst_59 : f32 to vector<16x1xf32>
    %142 = arith.addf %138, %141 : vector<16x1xf32>
    %143 = math.rsqrt %142 : vector<16x1xf32>
    %144 = vector.broadcast %143 : vector<16x1xf32> to vector<16x32xf32>
    %145 = arith.mulf %140, %144 : vector<16x32xf32>
    %146 = vector.broadcast %55 : vector<1x32xf32> to vector<16x32xf32>
    %147 = arith.mulf %145, %146 : vector<16x32xf32>
    %148 = vector.broadcast %57 : vector<1x32xf32> to vector<16x32xf32>
    %149 = arith.addf %147, %148 : vector<16x32xf32>
    %cst_60 = arith.constant dense<0.000000e+00> : vector<16x64xf32>
    %150 = tpu.matmul %149, %45, %cst_60 {dimension_numbers = #tpu.dot_dimension_numbers<[1], [0], [0], [1], [0, 0, 1, 1], [], []>} : vector<16x32xf32>, vector<32x64xf32>, vector<16x64xf32> -> vector<16x64xf32>
    %151 = vector.broadcast %61 : vector<1x64xf32> to vector<16x64xf32>
    %152 = arith.addf %150, %151 : vector<16x64xf32>
    %cst_61 = arith.constant 0.000000e+00 : f32
    %153 = vector.broadcast %cst_61 : f32 to vector<16x64xf32>
    %154 = arith.maximumf %152, %153 : vector<16x64xf32>
    %cst_62 = arith.constant dense<0.000000e+00> : vector<16x32xf32>
    %155 = tpu.matmul %154, %47, %cst_62 {dimension_numbers = #tpu.dot_dimension_numbers<[1], [0], [0], [1], [0, 0, 1, 1], [], []>} : vector<16x64xf32>, vector<64x32xf32>, vector<16x32xf32> -> vector<16x32xf32>
    %156 = vector.broadcast %59 : vector<1x32xf32> to vector<16x32xf32>
    %157 = arith.addf %155, %156 : vector<16x32xf32>
    %158 = arith.addf %127, %157 : vector<16x32xf32>
    %159 = vector.broadcast %3 : vector<16x1xf32> to vector<16x32xf32>
    %160 = arith.mulf %158, %159 : vector<16x32xf32>
    %c1 = arith.constant 1 : index
    %c0_63 = arith.constant 0 : index
    %c0_64 = arith.constant 0 : index
    %161 = vector.load %arg3[%c1, %c0_63, %c0_64] : memref<2x136x96xf32, #tpu.memory_space<vmem>>, vector<1x32x96xf32>
    %162 = vector.shape_cast %161 : vector<1x32x96xf32> to vector<32x96xf32>
    %c1_65 = arith.constant 1 : index
    %c32_66 = arith.constant 32 : index
    %c0_67 = arith.constant 0 : index
    %163 = vector.load %arg3[%c1_65, %c32_66, %c0_67] : memref<2x136x96xf32, #tpu.memory_space<vmem>>, vector<1x32x32xf32>
    %164 = vector.shape_cast %163 : vector<1x32x32xf32> to vector<32x32xf32>
    %c1_68 = arith.constant 1 : index
    %c32_69 = arith.constant 32 : index
    %c32_70 = arith.constant 32 : index
    %165 = vector.load %arg3[%c1_68, %c32_69, %c32_70] : memref<2x136x96xf32, #tpu.memory_space<vmem>>, vector<1x32x64xf32>
    %166 = vector.shape_cast %165 : vector<1x32x64xf32> to vector<32x64xf32>
    %c1_71 = arith.constant 1 : index
    %c64_72 = arith.constant 64 : index
    %c0_73 = arith.constant 0 : index
    %167 = vector.load %arg3[%c1_71, %c64_72, %c0_73] : memref<2x136x96xf32, #tpu.memory_space<vmem>>, vector<1x64x32xf32>
    %168 = vector.shape_cast %167 : vector<1x64x32xf32> to vector<64x32xf32>
    %c1_74 = arith.constant 1 : index
    %c128_75 = arith.constant 128 : index
    %c0_76 = arith.constant 0 : index
    %169 = vector.load %arg3[%c1_74, %c128_75, %c0_76] : memref<2x136x96xf32, #tpu.memory_space<vmem>>, vector<1x1x32xf32>
    %170 = vector.shape_cast %169 : vector<1x1x32xf32> to vector<1x32xf32>
    %c1_77 = arith.constant 1 : index
    %c128_78 = arith.constant 128 : index
    %c32_79 = arith.constant 32 : index
    %171 = vector.load %arg3[%c1_77, %c128_78, %c32_79] : memref<2x136x96xf32, #tpu.memory_space<vmem>>, vector<1x1x32xf32>
    %172 = vector.shape_cast %171 : vector<1x1x32xf32> to vector<1x32xf32>
    %c1_80 = arith.constant 1 : index
    %c128_81 = arith.constant 128 : index
    %c64_82 = arith.constant 64 : index
    %173 = vector.load %arg3[%c1_80, %c128_81, %c64_82] : memref<2x136x96xf32, #tpu.memory_space<vmem>>, vector<1x1x32xf32>
    %174 = vector.shape_cast %173 : vector<1x1x32xf32> to vector<1x32xf32>
    %c1_83 = arith.constant 1 : index
    %c129_84 = arith.constant 129 : index
    %c0_85 = arith.constant 0 : index
    %175 = vector.load %arg3[%c1_83, %c129_84, %c0_85] : memref<2x136x96xf32, #tpu.memory_space<vmem>>, vector<1x1x32xf32>
    %176 = vector.shape_cast %175 : vector<1x1x32xf32> to vector<1x32xf32>
    %c1_86 = arith.constant 1 : index
    %c129_87 = arith.constant 129 : index
    %c32_88 = arith.constant 32 : index
    %177 = vector.load %arg3[%c1_86, %c129_87, %c32_88] : memref<2x136x96xf32, #tpu.memory_space<vmem>>, vector<1x1x32xf32>
    %178 = vector.shape_cast %177 : vector<1x1x32xf32> to vector<1x32xf32>
    %c1_89 = arith.constant 1 : index
    %c129_90 = arith.constant 129 : index
    %c64_91 = arith.constant 64 : index
    %179 = vector.load %arg3[%c1_89, %c129_90, %c64_91] : memref<2x136x96xf32, #tpu.memory_space<vmem>>, vector<1x1x32xf32>
    %180 = vector.shape_cast %179 : vector<1x1x32xf32> to vector<1x32xf32>
    %c1_92 = arith.constant 1 : index
    %c130_93 = arith.constant 130 : index
    %c0_94 = arith.constant 0 : index
    %181 = vector.load %arg3[%c1_92, %c130_93, %c0_94] : memref<2x136x96xf32, #tpu.memory_space<vmem>>, vector<1x1x64xf32>
    %182 = vector.shape_cast %181 : vector<1x1x64xf32> to vector<1x64xf32>
    %cst_95 = arith.constant dense<0.000000e+00> : vector<16xf32>
    %183 = vector.multi_reduction <add>, %160, %cst_95 [1] : vector<16x32xf32> to vector<16xf32>
    %184 = vector.shape_cast %183 : vector<16xf32> to vector<16x1xf32>
    %cst_96 = arith.constant 3.200000e+01 : f32
    %185 = vector.broadcast %cst_96 : f32 to vector<16x1xf32>
    %186 = arith.divf %184, %185 : vector<16x1xf32>
    %187 = vector.broadcast %186 : vector<16x1xf32> to vector<16x32xf32>
    %188 = arith.subf %160, %187 : vector<16x32xf32>
    %189 = arith.mulf %188, %188 : vector<16x32xf32>
    %cst_97 = arith.constant dense<0.000000e+00> : vector<16xf32>
    %190 = vector.multi_reduction <add>, %189, %cst_97 [1] : vector<16x32xf32> to vector<16xf32>
    %191 = vector.shape_cast %190 : vector<16xf32> to vector<16x1xf32>
    %cst_98 = arith.constant 3.200000e+01 : f32
    %192 = vector.broadcast %cst_98 : f32 to vector<16x1xf32>
    %193 = arith.divf %191, %192 : vector<16x1xf32>
    %194 = vector.broadcast %186 : vector<16x1xf32> to vector<16x32xf32>
    %195 = arith.subf %160, %194 : vector<16x32xf32>
    %cst_99 = arith.constant 9.99999974E-6 : f32
    %196 = vector.broadcast %cst_99 : f32 to vector<16x1xf32>
    %197 = arith.addf %193, %196 : vector<16x1xf32>
    %198 = math.rsqrt %197 : vector<16x1xf32>
    %199 = vector.broadcast %198 : vector<16x1xf32> to vector<16x32xf32>
    %200 = arith.mulf %195, %199 : vector<16x32xf32>
    %201 = vector.broadcast %170 : vector<1x32xf32> to vector<16x32xf32>
    %202 = arith.mulf %200, %201 : vector<16x32xf32>
    %203 = vector.broadcast %172 : vector<1x32xf32> to vector<16x32xf32>
    %204 = arith.addf %202, %203 : vector<16x32xf32>
    %cst_100 = arith.constant dense<0.000000e+00> : vector<16x96xf32>
    %205 = tpu.matmul %204, %162, %cst_100 {dimension_numbers = #tpu.dot_dimension_numbers<[1], [0], [0], [1], [0, 0, 1, 1], [], []>} : vector<16x32xf32>, vector<32x96xf32>, vector<16x96xf32> -> vector<16x96xf32>
    %206 = vector.extract_strided_slice %205 {offsets = [0, 0], sizes = [16, 16], strides = [1, 1]} : vector<16x96xf32> to vector<16x16xf32>
    %207 = vector.extract_strided_slice %205 {offsets = [0, 32], sizes = [16, 16], strides = [1, 1]} : vector<16x96xf32> to vector<16x16xf32>
    %208 = vector.extract_strided_slice %205 {offsets = [0, 64], sizes = [16, 16], strides = [1, 1]} : vector<16x96xf32> to vector<16x16xf32>
    "tpu.trace_start"() <{level = 10 : i32, message = "qd,kd->qk"}> : () -> ()
    %cst_101 = arith.constant dense<0.000000e+00> : vector<16x16xf32>
    %209 = tpu.matmul %206, %207, %cst_101 {dimension_numbers = #tpu.dot_dimension_numbers<[1], [1], [0], [0], [0, 0, 1, 0], [], []>} : vector<16x16xf32>, vector<16x16xf32>, vector<16x16xf32> -> vector<16x16xf32>
    "tpu.trace_stop"() : () -> ()
    %cst_102 = arith.constant 2.500000e-01 : f32
    %210 = vector.broadcast %cst_102 : f32 to vector<16x16xf32>
    %211 = arith.mulf %209, %210 : vector<16x16xf32>
    %cst_103 = arith.constant -1.000000e+09 : f32
    %212 = vector.broadcast %cst_103 : f32 to vector<16x16xf32>
    %213 = arith.select %39, %212, %211 : vector<16x16xi1>, vector<16x16xf32>
    %cst_104 = arith.constant dense<0xFF800000> : vector<16xf32>
    %214 = vector.multi_reduction <maximumf>, %213, %cst_104 [1] : vector<16x16xf32> to vector<16xf32>
    %215 = vector.shape_cast %214 : vector<16xf32> to vector<16x1xf32>
    %216 = vector.broadcast %215 : vector<16x1xf32> to vector<16x16xf32>
    %217 = arith.subf %213, %216 : vector<16x16xf32>
    %218 = math.exp %217 : vector<16x16xf32>
    %cst_105 = arith.constant dense<0.000000e+00> : vector<16xf32>
    %219 = vector.multi_reduction <add>, %218, %cst_105 [1] : vector<16x16xf32> to vector<16xf32>
    %220 = vector.shape_cast %219 : vector<16xf32> to vector<16x1xf32>
    %221 = vector.broadcast %220 : vector<16x1xf32> to vector<16x16xf32>
    %222 = arith.divf %218, %221 : vector<16x16xf32>
    %cst_106 = arith.constant dense<0.000000e+00> : vector<16x16xf32>
    %223 = tpu.matmul %222, %208, %cst_106 {dimension_numbers = #tpu.dot_dimension_numbers<[1], [0], [0], [1], [0, 0, 1, 1], [], []>} : vector<16x16xf32>, vector<16x16xf32>, vector<16x16xf32> -> vector<16x16xf32>
    %224 = vector.extract_strided_slice %205 {offsets = [0, 16], sizes = [16, 16], strides = [1, 1]} : vector<16x96xf32> to vector<16x16xf32>
    %225 = vector.extract_strided_slice %205 {offsets = [0, 48], sizes = [16, 16], strides = [1, 1]} : vector<16x96xf32> to vector<16x16xf32>
    %226 = vector.extract_strided_slice %205 {offsets = [0, 80], sizes = [16, 16], strides = [1, 1]} : vector<16x96xf32> to vector<16x16xf32>
    "tpu.trace_start"() <{level = 10 : i32, message = "qd,kd->qk"}> : () -> ()
    %cst_107 = arith.constant dense<0.000000e+00> : vector<16x16xf32>
    %227 = tpu.matmul %224, %225, %cst_107 {dimension_numbers = #tpu.dot_dimension_numbers<[1], [1], [0], [0], [0, 0, 1, 0], [], []>} : vector<16x16xf32>, vector<16x16xf32>, vector<16x16xf32> -> vector<16x16xf32>
    "tpu.trace_stop"() : () -> ()
    %cst_108 = arith.constant 2.500000e-01 : f32
    %228 = vector.broadcast %cst_108 : f32 to vector<16x16xf32>
    %229 = arith.mulf %227, %228 : vector<16x16xf32>
    %cst_109 = arith.constant -1.000000e+09 : f32
    %230 = vector.broadcast %cst_109 : f32 to vector<16x16xf32>
    %231 = arith.select %39, %230, %229 : vector<16x16xi1>, vector<16x16xf32>
    %cst_110 = arith.constant dense<0xFF800000> : vector<16xf32>
    %232 = vector.multi_reduction <maximumf>, %231, %cst_110 [1] : vector<16x16xf32> to vector<16xf32>
    %233 = vector.shape_cast %232 : vector<16xf32> to vector<16x1xf32>
    %234 = vector.broadcast %233 : vector<16x1xf32> to vector<16x16xf32>
    %235 = arith.subf %231, %234 : vector<16x16xf32>
    %236 = math.exp %235 : vector<16x16xf32>
    %cst_111 = arith.constant dense<0.000000e+00> : vector<16xf32>
    %237 = vector.multi_reduction <add>, %236, %cst_111 [1] : vector<16x16xf32> to vector<16xf32>
    %238 = vector.shape_cast %237 : vector<16xf32> to vector<16x1xf32>
    %239 = vector.broadcast %238 : vector<16x1xf32> to vector<16x16xf32>
    %240 = arith.divf %236, %239 : vector<16x16xf32>
    %cst_112 = arith.constant dense<0.000000e+00> : vector<16x16xf32>
    %241 = tpu.matmul %240, %226, %cst_112 {dimension_numbers = #tpu.dot_dimension_numbers<[1], [0], [0], [1], [0, 0, 1, 1], [], []>} : vector<16x16xf32>, vector<16x16xf32>, vector<16x16xf32> -> vector<16x16xf32>
    %242 = tpu.concatenate %223, %241 in 1 : vector<16x16xf32>, vector<16x16xf32> -> vector<16x32xf32>
    %cst_113 = arith.constant dense<0.000000e+00> : vector<16x32xf32>
    %243 = tpu.matmul %242, %164, %cst_113 {dimension_numbers = #tpu.dot_dimension_numbers<[1], [0], [0], [1], [0, 0, 1, 1], [], []>} : vector<16x32xf32>, vector<32x32xf32>, vector<16x32xf32> -> vector<16x32xf32>
    %244 = vector.broadcast %174 : vector<1x32xf32> to vector<16x32xf32>
    %245 = arith.addf %243, %244 : vector<16x32xf32>
    %246 = arith.addf %245, %160 : vector<16x32xf32>
    %247 = vector.broadcast %3 : vector<16x1xf32> to vector<16x32xf32>
    %248 = arith.mulf %246, %247 : vector<16x32xf32>
    %cst_114 = arith.constant dense<0.000000e+00> : vector<16xf32>
    %249 = vector.multi_reduction <add>, %248, %cst_114 [1] : vector<16x32xf32> to vector<16xf32>
    %250 = vector.shape_cast %249 : vector<16xf32> to vector<16x1xf32>
    %cst_115 = arith.constant 3.200000e+01 : f32
    %251 = vector.broadcast %cst_115 : f32 to vector<16x1xf32>
    %252 = arith.divf %250, %251 : vector<16x1xf32>
    %253 = vector.broadcast %252 : vector<16x1xf32> to vector<16x32xf32>
    %254 = arith.subf %248, %253 : vector<16x32xf32>
    %255 = arith.mulf %254, %254 : vector<16x32xf32>
    %cst_116 = arith.constant dense<0.000000e+00> : vector<16xf32>
    %256 = vector.multi_reduction <add>, %255, %cst_116 [1] : vector<16x32xf32> to vector<16xf32>
    %257 = vector.shape_cast %256 : vector<16xf32> to vector<16x1xf32>
    %cst_117 = arith.constant 3.200000e+01 : f32
    %258 = vector.broadcast %cst_117 : f32 to vector<16x1xf32>
    %259 = arith.divf %257, %258 : vector<16x1xf32>
    %260 = vector.broadcast %252 : vector<16x1xf32> to vector<16x32xf32>
    %261 = arith.subf %248, %260 : vector<16x32xf32>
    %cst_118 = arith.constant 9.99999974E-6 : f32
    %262 = vector.broadcast %cst_118 : f32 to vector<16x1xf32>
    %263 = arith.addf %259, %262 : vector<16x1xf32>
    %264 = math.rsqrt %263 : vector<16x1xf32>
    %265 = vector.broadcast %264 : vector<16x1xf32> to vector<16x32xf32>
    %266 = arith.mulf %261, %265 : vector<16x32xf32>
    %267 = vector.broadcast %176 : vector<1x32xf32> to vector<16x32xf32>
    %268 = arith.mulf %266, %267 : vector<16x32xf32>
    %269 = vector.broadcast %178 : vector<1x32xf32> to vector<16x32xf32>
    %270 = arith.addf %268, %269 : vector<16x32xf32>
    %cst_119 = arith.constant dense<0.000000e+00> : vector<16x64xf32>
    %271 = tpu.matmul %270, %166, %cst_119 {dimension_numbers = #tpu.dot_dimension_numbers<[1], [0], [0], [1], [0, 0, 1, 1], [], []>} : vector<16x32xf32>, vector<32x64xf32>, vector<16x64xf32> -> vector<16x64xf32>
    %272 = vector.broadcast %182 : vector<1x64xf32> to vector<16x64xf32>
    %273 = arith.addf %271, %272 : vector<16x64xf32>
    %cst_120 = arith.constant 0.000000e+00 : f32
    %274 = vector.broadcast %cst_120 : f32 to vector<16x64xf32>
    %275 = arith.maximumf %273, %274 : vector<16x64xf32>
    %cst_121 = arith.constant dense<0.000000e+00> : vector<16x32xf32>
    %276 = tpu.matmul %275, %168, %cst_121 {dimension_numbers = #tpu.dot_dimension_numbers<[1], [0], [0], [1], [0, 0, 1, 1], [], []>} : vector<16x64xf32>, vector<64x32xf32>, vector<16x32xf32> -> vector<16x32xf32>
    %277 = vector.broadcast %180 : vector<1x32xf32> to vector<16x32xf32>
    %278 = arith.addf %276, %277 : vector<16x32xf32>
    %279 = arith.addf %248, %278 : vector<16x32xf32>
    %280 = vector.broadcast %3 : vector<16x1xf32> to vector<16x32xf32>
    %281 = arith.mulf %279, %280 : vector<16x32xf32>
    %c0_122 = arith.constant 0 : index
    %c0_123 = arith.constant 0 : index
    %282 = vector.load %arg4[%c0_122, %c0_123] : memref<16x32xf32, #tpu.memory_space<vmem>>, vector<16x32xf32>
    tpu.vector_store %arg4[%c0_122, %c0_123], %281 {strides = array<i32>} : memref<16x32xf32, #tpu.memory_space<vmem>>, vector<16x32xf32>,
    return
  }
  func.func @transform_0(%arg0: i32) -> (i32, i32) {
    %c0_i32 = arith.constant 0 : i32
    %c0_i32_0 = arith.constant 0 : i32
    %c0_i32_1 = arith.constant 0 : i32
    return %c0_i32, %c0_i32_0 : i32, i32
  }
  func.func @transform_1(%arg0: i32) -> (i32, i32) {
    %c0_i32 = arith.constant 0 : i32
    %c0_i32_0 = arith.constant 0 : i32
    %c0_i32_1 = arith.constant 0 : i32
    return %c0_i32, %c0_i32_0 : i32, i32
  }
  func.func @transform_2(%arg0: i32) -> (i32, i32, i32) {
    %c0_i32 = arith.constant 0 : i32
    %c0_i32_0 = arith.constant 0 : i32
    %c0_i32_1 = arith.constant 0 : i32
    %c0_i32_2 = arith.constant 0 : i32
    return %c0_i32, %c0_i32_0, %c0_i32_1 : i32, i32, i32
  }
  func.func @transform_3(%arg0: i32) -> (i32, i32) {
    %c0_i32 = arith.constant 0 : i32
    %c0_i32_0 = arith.constant 0 : i32
    %c0_i32_1 = arith.constant 0 : i32
    return %c0_i32, %c0_i32_0 : i32, i32
  }
}

</mosaic_0001>

<llo_original>
// kernel: encoder_forward.1
$region0: #{encoder_forward.1}
  #allocation0 [shape = 'u32[]', space=smem, size = 0x4, offset = 0x4, fixed_abs, tag = 'smem constant byte address 0x4 - core index']
  #allocation1 [shape = 'u32[144,128]{1,0:T(1,128)}', space=vmem, size = 0x12000, scoped, tag = 'internal scratch']
  %s0 = inlined_call_operand.vmem [shape: f32[16,34], index: 0, kind: input, shape index: {}]
  %s1 = inlined_call_operand.vmem [shape: f32[17,32], index: 1, kind: input, shape index: {}]
  %s2 = inlined_call_operand.vmem [shape: f32[2,136,96], index: 2, kind: input, shape index: {}]
  %s3 = inlined_call_operand.hbm [shape: f32[16,32], index: 3, kind: output, shape index: {}]
  %s4 = sld [smem:[#allocation0]]
  $region22: #{encoder_forward.1} parent=0
    _
  %s6 = ssub.s32 1, %s4
  %s7 = scalar_select 0, %s6, %s4
  $region1: #{encoder_forward.1} parent=0
    #allocation2 [shape = 'u8[8192]{0}', space=vmem, size = 0x2000, scoped, tag = 'output window, operand 0, single buffered']
    #allocation3 [shape = 's32[1]{0}', space=sflag, size = 0x4, scoped, tag = 'scoped memory for encoder_forward.1']
    %8 = vsyncpa [#allocation3], 0
    // Predicated region
    $region2: #{encoder_forward.1} parent=1 // pred_check
      _
    $region3: #{encoder_forward.1} parent=1 // pred_check_branch
      %10 = sbr.rel (0) target = $region5
    $region4: #{encoder_forward.1} parent=1 // pred_region
      _
    $region5: #{encoder_forward.1} parent=1 // pred_fallthru
      _
    // Predicated region
    $region6: #{encoder_forward.1} parent=1 // pred_check
      _
    $region7: #{encoder_forward.1} parent=1 // pred_check_branch
      %12 = sbr.rel (0) target = $region9
    $region8: #{encoder_forward.1} parent=1 // pred_region
      _
    $region9: #{encoder_forward.1} parent=1 // pred_fallthru
      _
    // Predicated region
    $region10: #{encoder_forward.1} parent=1 // pred_check
      _
    $region11: #{encoder_forward.1} parent=1 // pred_check_branch
      %14 = sbr.rel (0) target = $region13
    $region12: #{encoder_forward.1} parent=1 // pred_region
      _
    $region13: #{encoder_forward.1} parent=1 // pred_fallthru
      _
    %v15 = vld [vmem:[%s0] sm:$0xff]
    %v16 = vld [vmem:[%s0 + $0x8] sm:$0xff]
    %v17 = vld [vmem:[%s1] sm:$0xff]
    %v18 = vld [vmem:[%s1 + $0x8] sm:$0xff]
    %v19 = vld [vmem:[%s1 + $0x10] sm:$0x1]
    %21 = vset.pattern.permute.xlu0 32
    %22 = vperm.xlu0 %21, %v15
    %v23 = vpop.permute.xlu0 %22
    %26 = vset.pattern.permute.xlu0 32
    %27 = vperm.xlu0 %26, %v16
    %v28 = vpop.permute.xlu0 %27
    %v30 = vlaneseq
    %v31 = vshrl.u32 %v30, 7
    %v32 = vsub.s32 0, %v31
    %v33 = vrot.slane %v19, %v32
    %v34 = vmul.f32 %v23, %v33
    %v35 = vmul.f32 %v28, %v33
    %v36 = vadd.f32 %v17, %v34
    %v37 = vadd.f32 %v18, %v35
    %v38 = vlaneseq
    %v39 = vand.u32 %v38, 127
    %v40 = vand.u32 %v39, 1
    %vm41 = vcmp.eq.s32.totalorder %v40, 0
    %v42 = vand.u32 2147483647, %v36
    %vm43 = vcmp.le.f32.partialorder %v42, 0.7853982
    %vm44 = vcmp.lt.s32.totalorder %v36, 0
    %v45 = vand.u32 %v36, 2139095040
    %v46 = vshrl.u32 %v45, 23
    %v47 = vsub.s32 %v46, 127
    %v48 = vand.u32 2147483647, %v36
    %v49 = vand.u32 %v48, 8388607
    %v50 = vor.u32 %v49, 8388608
    %v51 = vsub.s32 0, %v50
    %v52 = vadd.s32 %v47, 1
    %vm53 = vcmp.gt.s32.totalorder %v52, 0
    %v54 = vsel %vm53, %v52, 0
    %v55 = vshrl.u32 %v54, 5
    %v56 = vand.u32 %v54, 31
    %v57 = vsub.s32 32, %v56
    %v58 = vshrl.u32 683565275, %v57
    %v59 = vshll.u32 683565275, %v56
    %v60 = vshrl.u32 2475754826, %v57
    %v61 = vor.u32 %v59, %v60
    %v62 = vshll.u32 2475754826, %v56
    %v63 = vshrl.u32 2131351028, %v57
    %v64 = vor.u32 %v62, %v63
    %v65 = vshll.u32 2131351028, %v56
    %v66 = vshrl.u32 2102212464, %v57
    %v67 = vor.u32 %v65, %v66
    %v68 = vshll.u32 2102212464, %v56
    %v69 = vshrl.u32 920167782, %v57
    %v70 = vor.u32 %v68, %v69
    %v71 = vshll.u32 920167782, %v56
    %v72 = vshrl.u32 1326507024, %v57
    %v73 = vor.u32 %v71, %v72
    %vm74 = vcmp.lt.s32.totalorder %v55, 1
    %vm75 = vcmp.lt.s32.totalorder %v55, 2
    %vm76 = vcmp.lt.s32.totalorder %v55, 3
    %vm77 = vcmp.lt.s32.totalorder %v55, 4
    %v78 = vsel %vm74, %v58, %v61
    %v79 = vsel %vm77, %v67, 2102212464
    %v80 = vsel %vm76, %v64, %v79
    %v81 = vsel %vm75, %v78, %v80
    %v82 = vsel %vm74, %v61, %v64
    %v83 = vsel %vm77, %v70, 920167782
    %v84 = vsel %vm76, %v67, %v83
    %v85 = vsel %vm75, %v82, %v84
    %v86 = vsel %vm74, %v64, %v67
    %v87 = vsel %vm77, %v73, 1326507024
    %v88 = vsel %vm76, %v70, %v87
    %v89 = vsel %vm75, %v86, %v88
    %v90 = vshll.u32 %v50, 8
    %v91 = vmul.u32.u64.compose %v90, %v89
    %v92 = vextract.low.u32 %v91
    %v93 = vextract.high.u32 %v91
    %v94 = vmul.u32.u64.compose %v90, %v85
    %v95 = vextract.low.u32 %v94
    %v96 = vextract.high.u32 %v94
    %v97 = vmul.u32 %v90, %v81
    %v98 = vadd.s32 %v93, %v95
    %vm99 = vc.u32 %v93, %v95
    %v100 = vadd.s32 %v96, 1
    %v101 = vsel %vm99, %v100, %v96
    %v102 = vadd.s32 %v97, %v101
    %v103 = vadd.s32 %v102, 536870912
    %v104 = vshrl.u32 %v103, 30
    %v105 = vshll.u32 %v104, 30
    %v106 = vsub.s32 %v102, %v105
    %vm107 = vcmp.lt.s32.totalorder %v106, 0
    %v108 = vsub.s32 0, %v106
    %v109 = vsel %vm107, %v108, %v106
    %v110 = vclz %v109
    %v111 = vsub.s32 %v110, 2
    %vm112 = vcmp.gt.s32.totalorder 0, %v111
    %v113 = vsel %vm112, 0, %v111
    %v114 = vsub.s32 32, %v113
    %v115 = vshll.u32 %v106, %v113
    %v116 = vshrl.u32 %v98, %v114
    %v117 = vor.u32 %v115, %v116
    %v118 = vsub.s32 4294967266, %v113
    %v119 = vadd.s32 %v118, 127
    %v120 = vshll.u32 %v119, 23
    %v121 = vor.u32 4788187, %v120
    %v122 = vand.u32 2147483647, %v121
    %v124 = vcvt.s32.f32 %v117
    %v125 = vmul.f32 %v124, %v122
    %v126 = vxor.u32 %v125, 2147483648
    %v127 = vsel %vm44, %v126, %v125
    %v128 = vsub.s32 4, %v104
    %v129 = vsel %vm44, %v128, %v104
    %v130 = vsel %vm43, %v36, %v127
    %v131 = vsel %vm43, 0, %v129
    %v132 = vcosq.f32.pop %v130
    %v133 = vsinq.f32.pop %v130
    %vm134 = vweird.f32 %v36
    %v135 = vadd.s32 %v131, 3
    %v136 = vand.u32 %v135, 3
    %vm137 = vcmp.lt.s32.totalorder %v136, 2
    %vm138 = vcmp.eq.s32.totalorder %v136, 0
    %v139 = vxor.u32 %v133, 2147483648
    %v140 = vsel %vm138, %v132, %v139
    %vm141 = vcmp.eq.s32.totalorder %v136, 2
    %v142 = vxor.u32 %v132, 2147483648
    %v143 = vsel %vm141, %v142, %v133
    %v144 = vsel %vm137, %v140, %v143
    %v145 = vsel %vm134, nan, %v144
    %v146 = vand.u32 2147483647, %v37
    %vm147 = vcmp.le.f32.partialorder %v146, 0.7853982
    %vm148 = vcmp.lt.s32.totalorder %v37, 0
    %v149 = vand.u32 %v37, 2139095040
    %v150 = vshrl.u32 %v149, 23
    %v151 = vsub.s32 %v150, 127
    %v152 = vand.u32 2147483647, %v37
    %v153 = vand.u32 %v152, 8388607
    %v154 = vor.u32 %v153, 8388608
    %v155 = vsub.s32 0, %v154
    %v156 = vadd.s32 %v151, 1
    %vm157 = vcmp.gt.s32.totalorder %v156, 0
    %v158 = vsel %vm157, %v156, 0
    %v159 = vshrl.u32 %v158, 5
    %v160 = vand.u32 %v158, 31
    %v161 = vsub.s32 32, %v160
    %v162 = vshrl.u32 683565275, %v161
    %v163 = vshll.u32 683565275, %v160
    %v164 = vshrl.u32 2475754826, %v161
    %v165 = vor.u32 %v163, %v164
    %v166 = vshll.u32 2475754826, %v160
    %v167 = vshrl.u32 2131351028, %v161
    %v168 = vor.u32 %v166, %v167
    %v169 = vshll.u32 2131351028, %v160
    %v170 = vshrl.u32 2102212464, %v161
    %v171 = vor.u32 %v169, %v170
    %v172 = vshll.u32 2102212464, %v160
    %v173 = vshrl.u32 920167782, %v161
    %v174 = vor.u32 %v172, %v173
    %v175 = vshll.u32 920167782, %v160
    %v176 = vshrl.u32 1326507024, %v161
    %v177 = vor.u32 %v175, %v176
    %vm178 = vcmp.lt.s32.totalorder %v159, 1
    %vm179 = vcmp.lt.s32.totalorder %v159, 2
    %vm180 = vcmp.lt.s32.totalorder %v159, 3
    %vm181 = vcmp.lt.s32.totalorder %v159, 4
    %v182 = vsel %vm178, %v162, %v165
    %v183 = vsel %vm181, %v171, 2102212464
    %v184 = vsel %vm180, %v168, %v183
    %v185 = vsel %vm179, %v182, %v184
    %v186 = vsel %vm178, %v165, %v168
    %v187 = vsel %vm181, %v174, 920167782
    %v188 = vsel %vm180, %v171, %v187
    %v189 = vsel %vm179, %v186, %v188
    %v190 = vsel %vm178, %v168, %v171
    %v191 = vsel %vm181, %v177, 1326507024
    %v192 = vsel %vm180, %v174, %v191
    %v193 = vsel %vm179, %v190, %v192
    %v194 = vshll.u32 %v154, 8
    %v195 = vmul.u32.u64.compose %v194, %v193
    %v196 = vextract.low.u32 %v195
    %v197 = vextract.high.u32 %v195
    %v198 = vmul.u32.u64.compose %v194, %v189
    %v199 = vextract.low.u32 %v198
    %v200 = vextract.high.u32 %v198
    %v201 = vmul.u32 %v194, %v185
    %v202 = vadd.s32 %v197, %v199
    %vm203 = vc.u32 %v197, %v199
    %v204 = vadd.s32 %v200, 1
    %v205 = vsel %vm203, %v204, %v200
    %v206 = vadd.s32 %v201, %v205
    %v207 = vadd.s32 %v206, 536870912
    %v208 = vshrl.u32 %v207, 30
    %v209 = vshll.u32 %v208, 30
    %v210 = vsub.s32 %v206, %v209
    %vm211 = vcmp.lt.s32.totalorder %v210, 0
    %v212 = vsub.s32 0, %v210
    %v213 = vsel %vm211, %v212, %v210
    %v214 = vclz %v213
    %v215 = vsub.s32 %v214, 2
    %vm216 = vcmp.gt.s32.totalorder 0, %v215
    %v217 = vsel %vm216, 0, %v215
    %v218 = vsub.s32 32, %v217
    %v219 = vshll.u32 %v210, %v217
    %v220 = vshrl.u32 %v202, %v218
    %v221 = vor.u32 %v219, %v220
    %v222 = vsub.s32 4294967266, %v217
    %v223 = vadd.s32 %v222, 127
    %v224 = vshll.u32 %v223, 23
    %v225 = vor.u32 4788187, %v224
    %v226 = vand.u32 2147483647, %v225
    %v228 = vcvt.s32.f32 %v221
    %v229 = vmul.f32 %v228, %v226
    %v230 = vxor.u32 %v229, 2147483648
    %v231 = vsel %vm148, %v230, %v229
    %v232 = vsub.s32 4, %v208
    %v233 = vsel %vm148, %v232, %v208
    %v234 = vsel %vm147, %v37, %v231
    %v235 = vsel %vm147, 0, %v233
    %v236 = vcosq.f32.pop %v234
    %v237 = vsinq.f32.pop %v234
    %vm238 = vweird.f32 %v37
    %v239 = vadd.s32 %v235, 3
    %v240 = vand.u32 %v239, 3
    %vm241 = vcmp.lt.s32.totalorder %v240, 2
    %vm242 = vcmp.eq.s32.totalorder %v240, 0
    %v243 = vxor.u32 %v237, 2147483648
    %v244 = vsel %vm242, %v236, %v243
    %vm245 = vcmp.eq.s32.totalorder %v240, 2
    %v246 = vxor.u32 %v236, 2147483648
    %v247 = vsel %vm245, %v246, %v237
    %v248 = vsel %vm241, %v244, %v247
    %v249 = vsel %vm238, nan, %v248
    %v250 = vand.u32 2147483647, %v36
    %vm251 = vcmp.le.f32.partialorder %v250, 0.7853982
    %vm252 = vcmp.lt.s32.totalorder %v36, 0
    %v253 = vand.u32 %v36, 2139095040
    %v254 = vshrl.u32 %v253, 23
    %v255 = vsub.s32 %v254, 127
    %v256 = vand.u32 2147483647, %v36
    %v257 = vand.u32 %v256, 8388607
    %v258 = vor.u32 %v257, 8388608
    %v259 = vsub.s32 0, %v258
    %v260 = vadd.s32 %v255, 1
    %vm261 = vcmp.gt.s32.totalorder %v260, 0
    %v262 = vsel %vm261, %v260, 0
    %v263 = vshrl.u32 %v262, 5
    %v264 = vand.u32 %v262, 31
    %v265 = vsub.s32 32, %v264
    %v266 = vshrl.u32 683565275, %v265
    %v267 = vshll.u32 683565275, %v264
    %v268 = vshrl.u32 2475754826, %v265
    %v269 = vor.u32 %v267, %v268
    %v270 = vshll.u32 2475754826, %v264
    %v271 = vshrl.u32 2131351028, %v265
    %v272 = vor.u32 %v270, %v271
    %v273 = vshll.u32 2131351028, %v264
    %v274 = vshrl.u32 2102212464, %v265
    %v275 = vor.u32 %v273, %v274
    %v276 = vshll.u32 2102212464, %v264
    %v277 = vshrl.u32 920167782, %v265
    %v278 = vor.u32 %v276, %v277
    %v279 = vshll.u32 920167782, %v264
    %v280 = vshrl.u32 1326507024, %v265
    %v281 = vor.u32 %v279, %v280
    %vm282 = vcmp.lt.s32.totalorder %v263, 1
    %vm283 = vcmp.lt.s32.totalorder %v263, 2
    %vm284 = vcmp.lt.s32.totalorder %v263, 3
    %vm285 = vcmp.lt.s32.totalorder %v263, 4
    %v286 = vsel %vm282, %v266, %v269
    %v287 = vsel %vm285, %v275, 2102212464
    %v288 = vsel %vm284, %v272, %v287
    %v289 = vsel %vm283, %v286, %v288
    %v290 = vsel %vm282, %v269, %v272
    %v291 = vsel %vm285, %v278, 920167782
    %v292 = vsel %vm284, %v275, %v291
    %v293 = vsel %vm283, %v290, %v292
    %v294 = vsel %vm282, %v272, %v275
    %v295 = vsel %vm285, %v281, 1326507024
    %v296 = vsel %vm284, %v278, %v295
    %v297 = vsel %vm283, %v294, %v296
    %v298 = vshll.u32 %v258, 8
    %v299 = vmul.u32.u64.compose %v298, %v297
    %v300 = vextract.low.u32 %v299
    %v301 = vextract.high.u32 %v299
    %v302 = vmul.u32.u64.compose %v298, %v293
    %v303 = vextract.low.u32 %v302
    %v304 = vextract.high.u32 %v302
    %v305 = vmul.u32 %v298, %v289
    %v306 = vadd.s32 %v301, %v303
    %vm307 = vc.u32 %v301, %v303
    %v308 = vadd.s32 %v304, 1
    %v309 = vsel %vm307, %v308, %v304
    %v310 = vadd.s32 %v305, %v309
    %v311 = vadd.s32 %v310, 536870912
    %v312 = vshrl.u32 %v311, 30
    %v313 = vshll.u32 %v312, 30
    %v314 = vsub.s32 %v310, %v313
    %vm315 = vcmp.lt.s32.totalorder %v314, 0
    %v316 = vsub.s32 0, %v314
    %v317 = vsel %vm315, %v316, %v314
    %v318 = vclz %v317
    %v319 = vsub.s32 %v318, 2
    %vm320 = vcmp.gt.s32.totalorder 0, %v319
    %v321 = vsel %vm320, 0, %v319
    %v322 = vsub.s32 32, %v321
    %v323 = vshll.u32 %v314, %v321
    %v324 = vshrl.u32 %v306, %v322
    %v325 = vor.u32 %v323, %v324
    %v326 = vsub.s32 4294967266, %v321
    %v327 = vadd.s32 %v326, 127
    %v328 = vshll.u32 %v327, 23
    %v329 = vor.u32 4788187, %v328
    %v330 = vand.u32 2147483647, %v329
    %v332 = vcvt.s32.f32 %v325
    %v333 = vmul.f32 %v332, %v330
    %v334 = vxor.u32 %v333, 2147483648
    %v335 = vsel %vm252, %v334, %v333
    %v336 = vsub.s32 4, %v312
    %v337 = vsel %vm252, %v336, %v312
    %v338 = vsel %vm251, %v36, %v335
    %v339 = vsel %vm251, 0, %v337
    %v340 = vcosq.f32.pop %v338
    %v341 = vsinq.f32.pop %v338
    %vm342 = vweird.f32 %v36
    %v343 = vand.u32 %v339, 3
    %vm344 = vcmp.lt.s32.totalorder %v343, 2
    %vm345 = vcmp.eq.s32.totalorder %v343, 0
    %v346 = vxor.u32 %v341, 2147483648
    %v347 = vsel %vm345, %v340, %v346
    %vm348 = vcmp.eq.s32.totalorder %v343, 2
    %v349 = vxor.u32 %v340, 2147483648
    %v350 = vsel %vm348, %v349, %v341
    %v351 = vsel %vm344, %v347, %v350
    %v352 = vsel %vm342, nan, %v351
    %v353 = vand.u32 2147483647, %v37
    %vm354 = vcmp.le.f32.partialorder %v353, 0.7853982
    %vm355 = vcmp.lt.s32.totalorder %v37, 0
    %v356 = vand.u32 %v37, 2139095040
    %v357 = vshrl.u32 %v356, 23
    %v358 = vsub.s32 %v357, 127
    %v359 = vand.u32 2147483647, %v37
    %v360 = vand.u32 %v359, 8388607
    %v361 = vor.u32 %v360, 8388608
    %v362 = vsub.s32 0, %v361
    %v363 = vadd.s32 %v358, 1
    %vm364 = vcmp.gt.s32.totalorder %v363, 0
    %v365 = vsel %vm364, %v363, 0
    %v366 = vshrl.u32 %v365, 5
    %v367 = vand.u32 %v365, 31
    %v368 = vsub.s32 32, %v367
    %v369 = vshrl.u32 683565275, %v368
    %v370 = vshll.u32 683565275, %v367
    %v371 = vshrl.u32 2475754826, %v368
    %v372 = vor.u32 %v370, %v371
    %v373 = vshll.u32 2475754826, %v367
    %v374 = vshrl.u32 2131351028, %v368
    %v375 = vor.u32 %v373, %v374
    %v376 = vshll.u32 2131351028, %v367
    %v377 = vshrl.u32 2102212464, %v368
    %v378 = vor.u32 %v376, %v377
    %v379 = vshll.u32 2102212464, %v367
    %v380 = vshrl.u32 920167782, %v368
    %v381 = vor.u32 %v379, %v380
    %v382 = vshll.u32 920167782, %v367
    %v383 = vshrl.u32 1326507024, %v368
    %v384 = vor.u32 %v382, %v383
    %vm385 = vcmp.lt.s32.totalorder %v366, 1
    %vm386 = vcmp.lt.s32.totalorder %v366, 2
    %vm387 = vcmp.lt.s32.totalorder %v366, 3
    %vm388 = vcmp.lt.s32.totalorder %v366, 4
    %v389 = vsel %vm385, %v369, %v372
    %v390 = vsel %vm388, %v378, 2102212464
    %v391 = vsel %vm387, %v375, %v390
    %v392 = vsel %vm386, %v389, %v391
    %v393 = vsel %vm385, %v372, %v375
    %v394 = vsel %vm388, %v381, 920167782
    %v395 = vsel %vm387, %v378, %v394
    %v396 = vsel %vm386, %v393, %v395
    %v397 = vsel %vm385, %v375, %v378
    %v398 = vsel %vm388, %v384, 1326507024
    %v399 = vsel %vm387, %v381, %v398
    %v400 = vsel %vm386, %v397, %v399
    %v401 = vshll.u32 %v361, 8
    %v402 = vmul.u32.u64.compose %v401, %v400
    %v403 = vextract.low.u32 %v402
    %v404 = vextract.high.u32 %v402
    %v405 = vmul.u32.u64.compose %v401, %v396
    %v406 = vextract.low.u32 %v405
    %v407 = vextract.high.u32 %v405
    %v408 = vmul.u32 %v401, %v392
    %v409 = vadd.s32 %v404, %v406
    %vm410 = vc.u32 %v404, %v406
    %v411 = vadd.s32 %v407, 1
    %v412 = vsel %vm410, %v411, %v407
    %v413 = vadd.s32 %v408, %v412
    %v414 = vadd.s32 %v413, 536870912
    %v415 = vshrl.u32 %v414, 30
    %v416 = vshll.u32 %v415, 30
    %v417 = vsub.s32 %v413, %v416
    %vm418 = vcmp.lt.s32.totalorder %v417, 0
    %v419 = vsub.s32 0, %v417
    %v420 = vsel %vm418, %v419, %v417
    %v421 = vclz %v420
    %v422 = vsub.s32 %v421, 2
    %vm423 = vcmp.gt.s32.totalorder 0, %v422
    %v424 = vsel %vm423, 0, %v422
    %v425 = vsub.s32 32, %v424
    %v426 = vshll.u32 %v417, %v424
    %v427 = vshrl.u32 %v409, %v425
    %v428 = vor.u32 %v426, %v427
    %v429 = vsub.s32 4294967266, %v424
    %v430 = vadd.s32 %v429, 127
    %v431 = vshll.u32 %v430, 23
    %v432 = vor.u32 4788187, %v431
    %v433 = vand.u32 2147483647, %v432
    %v435 = vcvt.s32.f32 %v428
    %v436 = vmul.f32 %v435, %v433
    %v437 = vxor.u32 %v436, 2147483648
    %v438 = vsel %vm355, %v437, %v436
    %v439 = vsub.s32 4, %v415
    %v440 = vsel %vm355, %v439, %v415
    %v441 = vsel %vm354, %v37, %v438
    %v442 = vsel %vm354, 0, %v440
    %v443 = vcosq.f32.pop %v441
    %v444 = vsinq.f32.pop %v441
    %vm445 = vweird.f32 %v37
    %v446 = vand.u32 %v442, 3
    %vm447 = vcmp.lt.s32.totalorder %v446, 2
    %vm448 = vcmp.eq.s32.totalorder %v446, 0
    %v449 = vxor.u32 %v444, 2147483648
    %v450 = vsel %vm448, %v443, %v449
    %vm451 = vcmp.eq.s32.totalorder %v446, 2
    %v452 = vxor.u32 %v443, 2147483648
    %v453 = vsel %vm451, %v452, %v444
    %v454 = vsel %vm447, %v450, %v453
    %v455 = vsel %vm445, nan, %v454
    %v456 = vsel %vm41, %v145, %v352
    %v457 = vsel %vm41, %v249, %v455
    %v458 = vadd.f32 %v456, %v15
    %v459 = vadd.f32 %v457, %v16
    %v460 = vlaneseq
    %v461 = vshrl.u32 %v460, 7
    %v462 = vadd.s32 %v461, 8
    %v463 = vcvt.s32.f32 %v461
    %v464 = vcvt.s32.f32 %v462
    %v465 = vadd.f32 %v463, 0.5
    %v466 = vadd.f32 %v464, 0.5
    %v467 = vmul.f32 %v465, 0.125
    %v468 = vmul.f32 %v466, 0.125
    %v469 = vfloor.f32 %v467
    %v470 = vfloor.f32 %v468
    %v471 = vcvt.s32.f32 %v39
    %v472 = vadd.f32 %v471, 0.5
    %v473 = vmul.f32 %v472, 0.125
    %v474 = vfloor.f32 %v473
    %vm475 = vcmp.gt.s32.totalorder %v39, %v461
    %vm476 = vcmp.gt.s32.totalorder %v39, %v462
    %vm477 = vcmp.ne.f32.partialorder %v469, %v474
    %vm478 = vcmp.ne.f32.partialorder %v470, %v474
    %vm479 = vmor %vm475, %vm477
    %vm480 = vmor %vm476, %vm478
    %vm481 = vcmp.lt.f32.partialorder %v15, 0.5
    %vm482 = vcmp.lt.f32.partialorder %v16, 0.5
    %v483 = vsel %vm481, 1, 0
    %v484 = vsel %vm482, 1, 0
    %485 = vset.pattern.permute.xlu0 33
    %486 = vperm.xlu0 %485, %v483
    %v487 = vpop.permute.xlu0 %486
    %488 = vset.pattern.permute.xlu0 33
    %489 = vperm.xlu0 %488, %v484
    %v490 = vpop.permute.xlu0 %489
    %vm491 = vcmp.eq.s32.totalorder %v487, 1
    %vm492 = vcmp.eq.s32.totalorder %v490, 1
    %vm493 = vmor %vm479, %vm491
    %vm494 = vmor %vm480, %vm492
    %v495 = vld [vmem:[%s2] sm:$0xff]
    %v496 = vld [vmem:[%s2 + $0x8] sm:$0xff]
    %v497 = vld [vmem:[%s2 + $0x10] sm:$0xff]
    %v498 = vld [vmem:[%s2 + $0x18] sm:$0xff]
    %v499 = vld [vmem:[%s2 + $0x20] sm:$0xff]
    %v500 = vld [vmem:[%s2 + $0x28] sm:$0xff]
    %v501 = vld [vmem:[%s2 + $0x30] sm:$0xff]
    %v502 = vld [vmem:[%s2 + $0x38] sm:$0xff]
    %v503 = vld [vmem:[%s2 + $0x40] sm:$0xff]
    %v504 = vld [vmem:[%s2 + $0x48] sm:$0xff]
    %v505 = vld [vmem:[%s2 + $0x50] sm:$0xff]
    %v506 = vld [vmem:[%s2 + $0x58] sm:$0xff]
    %v507 = vld [vmem:[%s2 + $0x60] sm:$0xff]
    %v508 = vld [vmem:[%s2 + $0x68] sm:$0xff]
    %v509 = vld [vmem:[%s2 + $0x70] sm:$0xff]
    %v510 = vld [vmem:[%s2 + $0x78] sm:$0xff]
    %v511 = vld [vmem:[%s2 + $0x80] sm:$0x1]
    %v512 = vld [vmem:[%s2 + $0x81] sm:$0x1]
    %v513 = vld [vmem:[%s2 + $0x82] sm:$0x1]
    %vm514 = vcmask 261120
    %v515 = vsel %vm514, %v458, 0.0
    %516 = vadd.xlane.f32.xlu0 %v515
    %v517 = vpop.xlane.xlu0 %516
    %v518 = vsel %vm514, %v459, 0.0
    %519 = vadd.xlane.f32.xlu0 %v518
    %v520 = vpop.xlane.xlu0 %519
    %v521 = vrcp.pop 32.0
    %v522 = vmul.f32 %v517, %v521
    %v523 = vmul.f32 %v520, %v521
    %v524 = vsub.f32 %v458, %v522
    %v525 = vsub.f32 %v459, %v523
    %v526 = vmul.f32 %v524, %v524
    %v527 = vmul.f32 %v525, %v525
    %v528 = vsel %vm514, %v526, 0.0
    %529 = vadd.xlane.f32.xlu0 %v528
    %v530 = vpop.xlane.xlu0 %529
    %v531 = vsel %vm514, %v527, 0.0
    %532 = vadd.xlane.f32.xlu0 %v531
    %v533 = vpop.xlane.xlu0 %532
    %v534 = vmul.f32 %v530, %v521
    %v535 = vmul.f32 %v533, %v521
    %v536 = vadd.f32 %v534, 1e-05
    %v537 = vadd.f32 %v535, 1e-05
    %v538 = vrsqrt.pop %v536
    %v539 = vrsqrt.pop %v537
    %v540 = vmul.f32 %v524, %v538
    %v541 = vmul.f32 %v525, %v539
    %v542 = vlaneseq
    %v543 = vshrl.u32 %v542, 7
    %v544 = vsub.s32 0, %v543
    %v545 = vrot.slane %v511, %v544
    %v546 = vmul.f32 %v540, %v545
    %v547 = vmul.f32 %v541, %v545
    %549 = vrot.lane.b32.xlu0 %v545, 96
    %v550 = vpop.permute.xlu0 %549
    %v552 = vadd.f32 %v546, %v550
    %v553 = vadd.f32 %v547, %v550
    %v555 = vsel %vm514, %v552, 0
    %v558 = vsel %vm514, %v553, 0
    %560 = vmatprep.subr.mxu0 0.0
    %561 = vmatpush1.msra.mxu0 %v495
    %562 = vmatprep.subr.mxu0 0.0
    %563 = vmatpush1.msra.mxu0 %v496
    %564 = vmatprep.subr.mxu0 0.0
    %565 = vmatpush1.msra.mxu0 %v497
    %566 = vmatprep.subr.mxu0 0.0
    %567 = vmatpush1.msra.mxu0 %v498
    %568 = vmatprep.subr.mxu0 0.0
    %569 = vmatpush1.msra.mxu0 0.0
    %570 = vmatprep.subr.mxu0 0.0
    %571 = vmatpush1.msra.mxu0 0.0
    %572 = vmatprep.subr.mxu0 0.0
    %573 = vmatpush1.msra.mxu0 0.0
    %574 = vmatprep.subr.mxu0 0.0
    %575 = vmatpush1.msra.mxu0 0.0
    %576 = vmatprep.subr.mxu0 0.0
    %577 = vmatpush1.msra.mxu0 0.0
    %578 = vmatprep.subr.mxu0 0.0
    %579 = vmatpush1.msra.mxu0 0.0
    %580 = vmatprep.subr.mxu0 0.0
    %581 = vmatpush1.msra.mxu0 0.0
    %582 = vmatprep.subr.mxu0 0.0
    %583 = vmatpush1.msra.mxu0 0.0
    %584 = vmatprep.subr.mxu0 0.0
    %585 = vmatpush1.msra.mxu0 0.0
    %586 = vmatprep.subr.mxu0 0.0
    %587 = vmatpush1.msra.mxu0 0.0
    %588 = vmatprep.subr.mxu0 0.0
    %589 = vmatpush1.msra.mxu0 0.0
    %590 = vmatprep.subr.mxu0 0.0
    %591 = vmatpush1.msra.mxu0 0.0
    %592 = vmatprep.subr.mxu0 0.0
    %593 = vmatpush1.msra.mxu0 0.0
    %594 = vmatprep.subr.mxu0 0.0
    %595 = vmatpush1.msra.mxu0 0.0
    %596 = vmatprep.subr.mxu0 0.0
    %597 = vmatpush1.msra.mxu0 0.0
    %598 = vmatprep.subr.mxu0 0.0
    %599 = vmatpush1.msra.mxu0 0.0
    %600 = vmatprep.subr.mxu0 0.0
    %601 = vmatpush1.msra.mxu0 0.0
    %602 = vmatprep.subr.mxu0 0.0
    %603 = vmatpush1.msra.mxu0 0.0
    %604 = vmatprep.subr.mxu0 0.0
    %605 = vmatpush1.msra.mxu0 0.0
    %606 = vmatprep.subr.mxu0 0.0
    %607 = vmatpush1.msra.mxu0 0.0
    %608 = vmatprep.subr.mxu0 0.0
    %609 = vmatpush1.msra.mxu0 0.0
    %610 = vmatprep.subr.mxu0 0.0
    %611 = vmatpush1.msra.mxu0 0.0
    %612 = vmatprep.subr.mxu0 0.0
    %613 = vmatpush1.msra.mxu0 0.0
    %614 = vmatprep.subr.mxu0 0.0
    %615 = vmatpush1.msra.mxu0 0.0
    %616 = vmatprep.subr.mxu0 0.0
    %617 = vmatpush1.msra.mxu0 0.0
    %618 = vmatprep.subr.mxu0 0.0
    %619 = vmatpush1.msra.mxu0 0.0
    %620 = vmatprep.subr.mxu0 0.0
    %621 = vmatpush1.msra.mxu0 0.0
    %622 = vmatprep.subr.mxu0 0.0
    %623 = vmatpush1.msra.mxu0 0.0
    %624 = vmatprep.mubr.f32.mxu0 0.0
    %625 = vmatmul.mubr.f32.gmra.mrb[0].mxu0 %v555
    %v626 = vpop.f32.mrb[0].mxu0
    %v627 = vadd.f32 0.0, %v626
    %v628 = vpop.f32.mrb[0].mxu0
    %629 = vmatprep.mubr.f32.mxu0 0.0
    %630 = vmatmul.mubr.f32.gmra.mrb[0].mxu0 %v558
    %v631 = vpop.f32.mrb[0].mxu0
    %v632 = vadd.f32 0.0, %v631
    %v633 = vpop.f32.mrb[0].mxu0
    %634 = vdwg.mxu0
    %637 = vrot.lane.b32.xlu0 %v627, 96
    %v638 = vpop.permute.xlu0 %637
    %639 = vrot.lane.b32.xlu0 %v632, 96
    %v640 = vpop.permute.xlu0 %639
    %vm641 = vcmask 130048
    %v642 = vsel %vm641, %v627, 0
    %v644 = vsel %vm641, %v632, 0
    %v646 = vsel %vm641, %v638, 0
    %v648 = vsel %vm641, %v640, 0
    %650 = vmatprep.subr.mxu0 0.0
    %651 = vmatpush1.xpose.msra.mxu0 %v646
    %652 = vmatprep.subr.mxu0 0.0
    %653 = vmatpush1.xpose.msra.mxu0 %v648
    %654 = vmatprep.subr.mxu0 0.0
    %655 = vmatpush1.xpose.msra.mxu0 0.0
    %656 = vmatprep.subr.mxu0 0.0
    %657 = vmatpush1.xpose.msra.mxu0 0.0
    %658 = vmatprep.subr.mxu0 0.0
    %659 = vmatpush1.xpose.msra.mxu0 0.0
    %660 = vmatprep.subr.mxu0 0.0
    %661 = vmatpush1.xpose.msra.mxu0 0.0
    %662 = vmatprep.subr.mxu0 0.0
    %663 = vmatpush1.xpose.msra.mxu0 0.0
    %664 = vmatprep.subr.mxu0 0.0
    %665 = vmatpush1.xpose.msra.mxu0 0.0
    %666 = vmatprep.subr.mxu0 0.0
    %667 = vmatpush1.xpose.msra.mxu0 0.0
    %668 = vmatprep.subr.mxu0 0.0
    %669 = vmatpush1.xpose.msra.mxu0 0.0
    %670 = vmatprep.subr.mxu0 0.0
    %671 = vmatpush1.xpose.msra.mxu0 0.0
    %672 = vmatprep.subr.mxu0 0.0
    %673 = vmatpush1.xpose.msra.mxu0 0.0
    %674 = vmatprep.subr.mxu0 0.0
    %675 = vmatpush1.xpose.msra.mxu0 0.0
    %676 = vmatprep.subr.mxu0 0.0
    %677 = vmatpush1.xpose.msra.mxu0 0.0
    %678 = vmatprep.subr.mxu0 0.0
    %679 = vmatpush1.xpose.msra.mxu0 0.0
    %680 = vmatprep.subr.mxu0 0.0
    %681 = vmatpush1.xpose.msra.mxu0 0.0
    %682 = vmatprep.subr.mxu0 0.0
    %683 = vmatpush1.xpose.msra.mxu0 0.0
    %684 = vmatprep.subr.mxu0 0.0
    %685 = vmatpush1.xpose.msra.mxu0 0.0
    %686 = vmatprep.subr.mxu0 0.0
    %687 = vmatpush1.xpose.msra.mxu0 0.0
    %688 = vmatprep.subr.mxu0 0.0
    %689 = vmatpush1.xpose.msra.mxu0 0.0
    %690 = vmatprep.subr.mxu0 0.0
    %691 = vmatpush1.xpose.msra.mxu0 0.0
    %692 = vmatprep.subr.mxu0 0.0
    %693 = vmatpush1.xpose.msra.mxu0 0.0
    %694 = vmatprep.subr.mxu0 0.0
    %695 = vmatpush1.xpose.msra.mxu0 0.0
    %696 = vmatprep.subr.mxu0 0.0
    %697 = vmatpush1.xpose.msra.mxu0 0.0
    %698 = vmatprep.subr.mxu0 0.0
    %699 = vmatpush1.xpose.msra.mxu0 0.0
    %700 = vmatprep.subr.mxu0 0.0
    %701 = vmatpush1.xpose.msra.mxu0 0.0
    %702 = vmatprep.subr.mxu0 0.0
    %703 = vmatpush1.xpose.msra.mxu0 0.0
    %704 = vmatprep.subr.mxu0 0.0
    %705 = vmatpush1.xpose.msra.mxu0 0.0
    %706 = vmatprep.subr.mxu0 0.0
    %707 = vmatpush1.xpose.msra.mxu0 0.0
    %708 = vmatprep.subr.mxu0 0.0
    %709 = vmatpush1.xpose.msra.mxu0 0.0
    %710 = vmatprep.subr.mxu0 0.0
    %711 = vmatpush1.xpose.msra.mxu0 0.0
    %712 = vmatprep.subr.mxu0 0.0
    %713 = vmatpush1.xpose.msra.mxu0 0.0
    %714 = vmatprep.mubr.f32.mxu0 0.0
    %715 = vmatmul.mubr.f32.gmra.mrb[0].mxu0 %v642
    %v716 = vpop.f32.mrb[0].mxu0
    %v717 = vadd.f32 0.0, %v716
    %v718 = vpop.f32.mrb[0].mxu0
    %719 = vmatprep.mubr.f32.mxu0 0.0
    %720 = vmatmul.mubr.f32.gmra.mrb[0].mxu0 %v644
    %v721 = vpop.f32.mrb[0].mxu0
    %v722 = vadd.f32 0.0, %v721
    %v723 = vpop.f32.mrb[0].mxu0
    %724 = vdwg.mxu0
    %v725 = vmul.f32 %v717, 0.25
    %v726 = vmul.f32 %v722, 0.25
    %v727 = vsel %vm493, -1e+09, %v725
    %v728 = vsel %vm494, -1e+09, %v726
    %v729 = vsel %vm641, %v727, -inf
    %730 = vmax.xlane.f32.xlu0 %v729
    %v731 = vpop.xlane.xlu0 %730
    %v732 = vsel %vm641, %v728, -inf
    %733 = vmax.xlane.f32.xlu0 %v732
    %v734 = vpop.xlane.xlu0 %733
    %v735 = vsub.f32 %v727, %v731
    %v736 = vsub.f32 %v728, %v734
    %v737 = vmul.f32 %v735, 1.442695
    %v738 = vpow.pop %v737
    %v739 = vmul.f32 %v736, 1.442695
    %v740 = vpow.pop %v739
    %v741 = vsel %vm641, %v738, 0.0
    %742 = vadd.xlane.f32.xlu0 %v741
    %v743 = vpop.xlane.xlu0 %742
    %v744 = vsel %vm641, %v740, 0.0
    %745 = vadd.xlane.f32.xlu0 %v744
    %v746 = vpop.xlane.xlu0 %745
    %v747 = vrcp.pop %v743
    %v748 = vmul.f32 %v738, %v747
    %v749 = vrcp.pop %v746
    %v750 = vmul.f32 %v740, %v749
    %751 = vrot.lane.b32.xlu0 %v627, 64
    %v752 = vpop.permute.xlu0 %751
    %753 = vrot.lane.b32.xlu0 %v632, 64
    %v754 = vpop.permute.xlu0 %753
    %v758 = vsel %vm641, %v748, 0
    %v761 = vsel %vm641, %v750, 0
    %763 = vmatprep.subr.mxu0 0.0
    %764 = vmatpush1.msra.mxu0 %v752
    %765 = vmatprep.subr.mxu0 0.0
    %766 = vmatpush1.msra.mxu0 %v754
    %767 = vmatprep.subr.mxu0 0.0
    %768 = vmatpush1.msra.mxu0 0.0
    %769 = vmatprep.subr.mxu0 0.0
    %770 = vmatpush1.msra.mxu0 0.0
    %771 = vmatprep.subr.mxu0 0.0
    %772 = vmatpush1.msra.mxu0 0.0
    %773 = vmatprep.subr.mxu0 0.0
    %774 = vmatpush1.msra.mxu0 0.0
    %775 = vmatprep.subr.mxu0 0.0
    %776 = vmatpush1.msra.mxu0 0.0
    %777 = vmatprep.subr.mxu0 0.0
    %778 = vmatpush1.msra.mxu0 0.0
    %779 = vmatprep.subr.mxu0 0.0
    %780 = vmatpush1.msra.mxu0 0.0
    %781 = vmatprep.subr.mxu0 0.0
    %782 = vmatpush1.msra.mxu0 0.0
    %783 = vmatprep.subr.mxu0 0.0
    %784 = vmatpush1.msra.mxu0 0.0
    %785 = vmatprep.subr.mxu0 0.0
    %786 = vmatpush1.msra.mxu0 0.0
    %787 = vmatprep.subr.mxu0 0.0
    %788 = vmatpush1.msra.mxu0 0.0
    %789 = vmatprep.subr.mxu0 0.0
    %790 = vmatpush1.msra.mxu0 0.0
    %791 = vmatprep.subr.mxu0 0.0
    %792 = vmatpush1.msra.mxu0 0.0
    %793 = vmatprep.subr.mxu0 0.0
    %794 = vmatpush1.msra.mxu0 0.0
    %795 = vmatprep.subr.mxu0 0.0
    %796 = vmatpush1.msra.mxu0 0.0
    %797 = vmatprep.subr.mxu0 0.0
    %798 = vmatpush1.msra.mxu0 0.0
    %799 = vmatprep.subr.mxu0 0.0
    %800 = vmatpush1.msra.mxu0 0.0
    %801 = vmatprep.subr.mxu0 0.0
    %802 = vmatpush1.msra.mxu0 0.0
    %803 = vmatprep.subr.mxu0 0.0
    %804 = vmatpush1.msra.mxu0 0.0
    %805 = vmatprep.subr.mxu0 0.0
    %806 = vmatpush1.msra.mxu0 0.0
    %807 = vmatprep.subr.mxu0 0.0
    %808 = vmatpush1.msra.mxu0 0.0
    %809 = vmatprep.subr.mxu0 0.0
    %810 = vmatpush1.msra.mxu0 0.0
    %811 = vmatprep.subr.mxu0 0.0
    %812 = vmatpush1.msra.mxu0 0.0
    %813 = vmatprep.subr.mxu0 0.0
    %814 = vmatpush1.msra.mxu0 0.0
    %815 = vmatprep.subr.mxu0 0.0
    %816 = vmatpush1.msra.mxu0 0.0
    %817 = vmatprep.subr.mxu0 0.0
    %818 = vmatpush1.msra.mxu0 0.0
    %819 = vmatprep.subr.mxu0 0.0
    %820 = vmatpush1.msra.mxu0 0.0
    %821 = vmatprep.subr.mxu0 0.0
    %822 = vmatpush1.msra.mxu0 0.0
    %823 = vmatprep.subr.mxu0 0.0
    %824 = vmatpush1.msra.mxu0 0.0
    %825 = vmatprep.subr.mxu0 0.0
    %826 = vmatpush1.msra.mxu0 0.0
    %827 = vmatprep.mubr.f32.mxu0 0.0
    %828 = vmatmul.mubr.f32.gmra.mrb[0].mxu0 %v758
    %v829 = vpop.f32.mrb[0].mxu0
    %v830 = vadd.f32 0.0, %v829
    %v831 = vpop.f32.mrb[0].mxu0
    %832 = vmatprep.mubr.f32.mxu0 0.0
    %833 = vmatmul.mubr.f32.gmra.mrb[0].mxu0 %v761
    %v834 = vpop.f32.mrb[0].mxu0
    %v835 = vadd.f32 0.0, %v834
    %v836 = vpop.f32.mrb[0].mxu0
    %837 = vdwg.mxu0
    %838 = vrot.lane.b32.xlu0 %v627, 112
    %v839 = vpop.permute.xlu0 %838
    %840 = vrot.lane.b32.xlu0 %v632, 112
    %v841 = vpop.permute.xlu0 %840
    %842 = vrot.lane.b32.xlu0 %v627, 80
    %v843 = vpop.permute.xlu0 %842
    %844 = vrot.lane.b32.xlu0 %v632, 80
    %v845 = vpop.permute.xlu0 %844
    %v846 = vsel %vm641, %v839, 0
    %v848 = vsel %vm641, %v841, 0
    %v850 = vsel %vm641, %v843, 0
    %v852 = vsel %vm641, %v845, 0
    %854 = vmatprep.subr.mxu0 0.0
    %855 = vmatpush1.xpose.msra.mxu0 %v850
    %856 = vmatprep.subr.mxu0 0.0
    %857 = vmatpush1.xpose.msra.mxu0 %v852
    %858 = vmatprep.subr.mxu0 0.0
    %859 = vmatpush1.xpose.msra.mxu0 0.0
    %860 = vmatprep.subr.mxu0 0.0
    %861 = vmatpush1.xpose.msra.mxu0 0.0
    %862 = vmatprep.subr.mxu0 0.0
    %863 = vmatpush1.xpose.msra.mxu0 0.0
    %864 = vmatprep.subr.mxu0 0.0
    %865 = vmatpush1.xpose.msra.mxu0 0.0
    %866 = vmatprep.subr.mxu0 0.0
    %867 = vmatpush1.xpose.msra.mxu0 0.0
    %868 = vmatprep.subr.mxu0 0.0
    %869 = vmatpush1.xpose.msra.mxu0 0.0
    %870 = vmatprep.subr.mxu0 0.0
    %871 = vmatpush1.xpose.msra.mxu0 0.0
    %872 = vmatprep.subr.mxu0 0.0
    %873 = vmatpush1.xpose.msra.mxu0 0.0
    %874 = vmatprep.subr.mxu0 0.0
    %875 = vmatpush1.xpose.msra.mxu0 0.0
    %876 = vmatprep.subr.mxu0 0.0
    %877 = vmatpush1.xpose.msra.mxu0 0.0
    %878 = vmatprep.subr.mxu0 0.0
    %879 = vmatpush1.xpose.msra.mxu0 0.0
    %880 = vmatprep.subr.mxu0 0.0
    %881 = vmatpush1.xpose.msra.mxu0 0.0
    %882 = vmatprep.subr.mxu0 0.0
    %883 = vmatpush1.xpose.msra.mxu0 0.0
    %884 = vmatprep.subr.mxu0 0.0
    %885 = vmatpush1.xpose.msra.mxu0 0.0
    %886 = vmatprep.subr.mxu0 0.0
    %887 = vmatpush1.xpose.msra.mxu0 0.0
    %888 = vmatprep.subr.mxu0 0.0
    %889 = vmatpush1.xpose.msra.mxu0 0.0
    %890 = vmatprep.subr.mxu0 0.0
    %891 = vmatpush1.xpose.msra.mxu0 0.0
    %892 = vmatprep.subr.mxu0 0.0
    %893 = vmatpush1.xpose.msra.mxu0 0.0
    %894 = vmatprep.subr.mxu0 0.0
    %895 = vmatpush1.xpose.msra.mxu0 0.0
    %896 = vmatprep.subr.mxu0 0.0
    %897 = vmatpush1.xpose.msra.mxu0 0.0
    %898 = vmatprep.subr.mxu0 0.0
    %899 = vmatpush1.xpose.msra.mxu0 0.0
    %900 = vmatprep.subr.mxu0 0.0
    %901 = vmatpush1.xpose.msra.mxu0 0.0
    %902 = vmatprep.subr.mxu0 0.0
    %903 = vmatpush1.xpose.msra.mxu0 0.0
    %904 = vmatprep.subr.mxu0 0.0
    %905 = vmatpush1.xpose.msra.mxu0 0.0
    %906 = vmatprep.subr.mxu0 0.0
    %907 = vmatpush1.xpose.msra.mxu0 0.0
    %908 = vmatprep.subr.mxu0 0.0
    %909 = vmatpush1.xpose.msra.mxu0 0.0
    %910 = vmatprep.subr.mxu0 0.0
    %911 = vmatpush1.xpose.msra.mxu0 0.0
    %912 = vmatprep.subr.mxu0 0.0
    %913 = vmatpush1.xpose.msra.mxu0 0.0
    %914 = vmatprep.subr.mxu0 0.0
    %915 = vmatpush1.xpose.msra.mxu0 0.0
    %916 = vmatprep.subr.mxu0 0.0
    %917 = vmatpush1.xpose.msra.mxu0 0.0
    %918 = vmatprep.mubr.f32.mxu0 0.0
    %919 = vmatmul.mubr.f32.gmra.mrb[0].mxu0 %v846
    %v920 = vpop.f32.mrb[0].mxu0
    %v921 = vadd.f32 0.0, %v920
    %v922 = vpop.f32.mrb[0].mxu0
    %923 = vmatprep.mubr.f32.mxu0 0.0
    %924 = vmatmul.mubr.f32.gmra.mrb[0].mxu0 %v848
    %v925 = vpop.f32.mrb[0].mxu0
    %v926 = vadd.f32 0.0, %v925
    %v927 = vpop.f32.mrb[0].mxu0
    %928 = vdwg.mxu0
    %v929 = vmul.f32 %v921, 0.25
    %v930 = vmul.f32 %v926, 0.25
    %v931 = vsel %vm493, -1e+09, %v929
    %v932 = vsel %vm494, -1e+09, %v930
    %v933 = vsel %vm641, %v931, -inf
    %934 = vmax.xlane.f32.xlu0 %v933
    %v935 = vpop.xlane.xlu0 %934
    %v936 = vsel %vm641, %v932, -inf
    %937 = vmax.xlane.f32.xlu0 %v936
    %v938 = vpop.xlane.xlu0 %937
    %v939 = vsub.f32 %v931, %v935
    %v940 = vsub.f32 %v932, %v938
    %v941 = vmul.f32 %v939, 1.442695
    %v942 = vpow.pop %v941
    %v943 = vmul.f32 %v940, 1.442695
    %v944 = vpow.pop %v943
    %v945 = vsel %vm641, %v942, 0.0
    %946 = vadd.xlane.f32.xlu0 %v945
    %v947 = vpop.xlane.xlu0 %946
    %v948 = vsel %vm641, %v944, 0.0
    %949 = vadd.xlane.f32.xlu0 %v948
    %v950 = vpop.xlane.xlu0 %949
    %v951 = vrcp.pop %v947
    %v952 = vmul.f32 %v942, %v951
    %v953 = vrcp.pop %v950
    %v954 = vmul.f32 %v944, %v953
    %955 = vrot.lane.b32.xlu0 %v627, 48
    %v956 = vpop.permute.xlu0 %955
    %957 = vrot.lane.b32.xlu0 %v632, 48
    %v958 = vpop.permute.xlu0 %957
    %v962 = vsel %vm641, %v952, 0
    %v965 = vsel %vm641, %v954, 0
    %967 = vmatprep.subr.mxu0 0.0
    %968 = vmatpush1.msra.mxu0 %v956
    %969 = vmatprep.subr.mxu0 0.0
    %970 = vmatpush1.msra.mxu0 %v958
    %971 = vmatprep.subr.mxu0 0.0
    %972 = vmatpush1.msra.mxu0 0.0
    %973 = vmatprep.subr.mxu0 0.0
    %974 = vmatpush1.msra.mxu0 0.0
    %975 = vmatprep.subr.mxu0 0.0
    %976 = vmatpush1.msra.mxu0 0.0
    %977 = vmatprep.subr.mxu0 0.0
    %978 = vmatpush1.msra.mxu0 0.0
    %979 = vmatprep.subr.mxu0 0.0
    %980 = vmatpush1.msra.mxu0 0.0
    %981 = vmatprep.subr.mxu0 0.0
    %982 = vmatpush1.msra.mxu0 0.0
    %983 = vmatprep.subr.mxu0 0.0
    %984 = vmatpush1.msra.mxu0 0.0
    %985 = vmatprep.subr.mxu0 0.0
    %986 = vmatpush1.msra.mxu0 0.0
    %987 = vmatprep.subr.mxu0 0.0
    %988 = vmatpush1.msra.mxu0 0.0
    %989 = vmatprep.subr.mxu0 0.0
    %990 = vmatpush1.msra.mxu0 0.0
    %991 = vmatprep.subr.mxu0 0.0
    %992 = vmatpush1.msra.mxu0 0.0
    %993 = vmatprep.subr.mxu0 0.0
    %994 = vmatpush1.msra.mxu0 0.0
    %995 = vmatprep.subr.mxu0 0.0
    %996 = vmatpush1.msra.mxu0 0.0
    %997 = vmatprep.subr.mxu0 0.0
    %998 = vmatpush1.msra.mxu0 0.0
    %999 = vmatprep.subr.mxu0 0.0
    %1000 = vmatpush1.msra.mxu0 0.0
    %1001 = vmatprep.subr.mxu0 0.0
    %1002 = vmatpush1.msra.mxu0 0.0
    %1003 = vmatprep.subr.mxu0 0.0
    %1004 = vmatpush1.msra.mxu0 0.0
    %1005 = vmatprep.subr.mxu0 0.0
    %1006 = vmatpush1.msra.mxu0 0.0
    %1007 = vmatprep.subr.mxu0 0.0
    %1008 = vmatpush1.msra.mxu0 0.0
    %1009 = vmatprep.subr.mxu0 0.0
    %1010 = vmatpush1.msra.mxu0 0.0
    %1011 = vmatprep.subr.mxu0 0.0
    %1012 = vmatpush1.msra.mxu0 0.0
    %1013 = vmatprep.subr.mxu0 0.0
    %1014 = vmatpush1.msra.mxu0 0.0
    %1015 = vmatprep.subr.mxu0 0.0
    %1016 = vmatpush1.msra.mxu0 0.0
    %1017 = vmatprep.subr.mxu0 0.0
    %1018 = vmatpush1.msra.mxu0 0.0
    %1019 = vmatprep.subr.mxu0 0.0
    %1020 = vmatpush1.msra.mxu0 0.0
    %1021 = vmatprep.subr.mxu0 0.0
    %1022 = vmatpush1.msra.mxu0 0.0
    %1023 = vmatprep.subr.mxu0 0.0
    %1024 = vmatpush1.msra.mxu0 0.0
    %1025 = vmatprep.subr.mxu0 0.0
    %1026 = vmatpush1.msra.mxu0 0.0
    %1027 = vmatprep.subr.mxu0 0.0
    %1028 = vmatpush1.msra.mxu0 0.0
    %1029 = vmatprep.subr.mxu0 0.0
    %1030 = vmatpush1.msra.mxu0 0.0
    %1031 = vmatprep.mubr.f32.mxu0 0.0
    %1032 = vmatmul.mubr.f32.gmra.mrb[0].mxu0 %v962
    %v1033 = vpop.f32.mrb[0].mxu0
    %v1034 = vadd.f32 0.0, %v1033
    %v1035 = vpop.f32.mrb[0].mxu0
    %1036 = vmatprep.mubr.f32.mxu0 0.0
    %1037 = vmatmul.mubr.f32.gmra.mrb[0].mxu0 %v965
    %v1038 = vpop.f32.mrb[0].mxu0
    %v1039 = vadd.f32 0.0, %v1038
    %v1040 = vpop.f32.mrb[0].mxu0
    %1041 = vdwg.mxu0
    %1044 = vrot.lane.b32.xlu0 %v1034, 16
    %v1045 = vpop.permute.xlu0 %1044
    %1046 = vrot.lane.b32.xlu0 %v1039, 16
    %v1047 = vpop.permute.xlu0 %1046
    %v1050 = vsel %vm641, %v830, %v1045
    %v1051 = vsel %vm641, %v835, %v1047
    %1052 = vrot.lane.b32.xlu0 %v545, 64
    %v1053 = vpop.permute.xlu0 %1052
    %v1056 = vsel %vm514, %v1050, 0
    %v1059 = vsel %vm514, %v1051, 0
    %1061 = vmatprep.subr.mxu0 0.0
    %1062 = vmatpush1.msra.mxu0 %v499
    %1063 = vmatprep.subr.mxu0 0.0
    %1064 = vmatpush1.msra.mxu0 %v500
    %1065 = vmatprep.subr.mxu0 0.0
    %1066 = vmatpush1.msra.mxu0 %v501
    %1067 = vmatprep.subr.mxu0 0.0
    %1068 = vmatpush1.msra.mxu0 %v502
    %1069 = vmatprep.subr.mxu0 0.0
    %1070 = vmatpush1.msra.mxu0 0.0
    %1071 = vmatprep.subr.mxu0 0.0
    %1072 = vmatpush1.msra.mxu0 0.0
    %1073 = vmatprep.subr.mxu0 0.0
    %1074 = vmatpush1.msra.mxu0 0.0
    %1075 = vmatprep.subr.mxu0 0.0
    %1076 = vmatpush1.msra.mxu0 0.0
    %1077 = vmatprep.subr.mxu0 0.0
    %1078 = vmatpush1.msra.mxu0 0.0
    %1079 = vmatprep.subr.mxu0 0.0
    %1080 = vmatpush1.msra.mxu0 0.0
    %1081 = vmatprep.subr.mxu0 0.0
    %1082 = vmatpush1.msra.mxu0 0.0
    %1083 = vmatprep.subr.mxu0 0.0
    %1084 = vmatpush1.msra.mxu0 0.0
    %1085 = vmatprep.subr.mxu0 0.0
    %1086 = vmatpush1.msra.mxu0 0.0
    %1087 = vmatprep.subr.mxu0 0.0
    %1088 = vmatpush1.msra.mxu0 0.0
    %1089 = vmatprep.subr.mxu0 0.0
    %1090 = vmatpush1.msra.mxu0 0.0
    %1091 = vmatprep.subr.mxu0 0.0
    %1092 = vmatpush1.msra.mxu0 0.0
    %1093 = vmatprep.subr.mxu0 0.0
    %1094 = vmatpush1.msra.mxu0 0.0
    %1095 = vmatprep.subr.mxu0 0.0
    %1096 = vmatpush1.msra.mxu0 0.0
    %1097 = vmatprep.subr.mxu0 0.0
    %1098 = vmatpush1.msra.mxu0 0.0
    %1099 = vmatprep.subr.mxu0 0.0
    %1100 = vmatpush1.msra.mxu0 0.0
    %1101 = vmatprep.subr.mxu0 0.0
    %1102 = vmatpush1.msra.mxu0 0.0
    %1103 = vmatprep.subr.mxu0 0.0
    %1104 = vmatpush1.msra.mxu0 0.0
    %1105 = vmatprep.subr.mxu0 0.0
    %1106 = vmatpush1.msra.mxu0 0.0
    %1107 = vmatprep.subr.mxu0 0.0
    %1108 = vmatpush1.msra.mxu0 0.0
    %1109 = vmatprep.subr.mxu0 0.0
    %1110 = vmatpush1.msra.mxu0 0.0
    %1111 = vmatprep.subr.mxu0 0.0
    %1112 = vmatpush1.msra.mxu0 0.0
    %1113 = vmatprep.subr.mxu0 0.0
    %1114 = vmatpush1.msra.mxu0 0.0
    %1115 = vmatprep.subr.mxu0 0.0
    %1116 = vmatpush1.msra.mxu0 0.0
    %1117 = vmatprep.subr.mxu0 0.0
    %1118 = vmatpush1.msra.mxu0 0.0
    %1119 = vmatprep.subr.mxu0 0.0
    %1120 = vmatpush1.msra.mxu0 0.0
    %1121 = vmatprep.subr.mxu0 0.0
    %1122 = vmatpush1.msra.mxu0 0.0
    %1123 = vmatprep.subr.mxu0 0.0
    %1124 = vmatpush1.msra.mxu0 0.0
    %1125 = vmatprep.mubr.f32.mxu0 0.0
    %1126 = vmatmul.mubr.f32.gmra.mrb[0].mxu0 %v1056
    %v1127 = vpop.f32.mrb[0].mxu0
    %v1128 = vadd.f32 %v1053, %v1127
    %v1129 = vpop.f32.mrb[0].mxu0
    %1130 = vmatprep.mubr.f32.mxu0 0.0
    %1131 = vmatmul.mubr.f32.gmra.mrb[0].mxu0 %v1059
    %v1132 = vpop.f32.mrb[0].mxu0
    %v1133 = vadd.f32 %v1053, %v1132
    %v1134 = vpop.f32.mrb[0].mxu0
    %1135 = vdwg.mxu0
    %v1136 = vadd.f32 %v1128, %v458
    %v1137 = vadd.f32 %v1133, %v459
    %1138 = vset.pattern.permute.xlu0 33
    %1139 = vperm.xlu0 %1138, %v15
    %v1140 = vpop.permute.xlu0 %1139
    %1142 = vset.pattern.permute.xlu0 33
    %1143 = vperm.xlu0 %1142, %v16
    %v1144 = vpop.permute.xlu0 %1143
    %v1146 = vmul.f32 %v1136, %v1140
    %v1147 = vmul.f32 %v1137, %v1144
    %v1148 = vsel %vm514, %v1146, 0.0
    %1149 = vadd.xlane.f32.xlu0 %v1148
    %v1150 = vpop.xlane.xlu0 %1149
    %v1151 = vsel %vm514, %v1147, 0.0
    %1152 = vadd.xlane.f32.xlu0 %v1151
    %v1153 = vpop.xlane.xlu0 %1152
    %v1154 = vmul.f32 %v1150, %v521
    %v1155 = vmul.f32 %v1153, %v521
    %v1156 = vsub.f32 %v1146, %v1154
    %v1157 = vsub.f32 %v1147, %v1155
    %v1158 = vmul.f32 %v1156, %v1156
    %v1159 = vmul.f32 %v1157, %v1157
    %v1160 = vsel %vm514, %v1158, 0.0
    %1161 = vadd.xlane.f32.xlu0 %v1160
    %v1162 = vpop.xlane.xlu0 %1161
    %v1163 = vsel %vm514, %v1159, 0.0
    %1164 = vadd.xlane.f32.xlu0 %v1163
    %v1165 = vpop.xlane.xlu0 %1164
    %v1166 = vmul.f32 %v1162, %v521
    %v1167 = vmul.f32 %v1165, %v521
    %v1168 = vadd.f32 %v1166, 1e-05
    %v1169 = vadd.f32 %v1167, 1e-05
    %v1170 = vrsqrt.pop %v1168
    %v1171 = vrsqrt.pop %v1169
    %v1172 = vmul.f32 %v1156, %v1170
    %v1173 = vmul.f32 %v1157, %v1171
    %v1174 = vlaneseq
    %v1175 = vshrl.u32 %v1174, 7
    %v1176 = vsub.s32 0, %v1175
    %v1177 = vrot.slane %v512, %v1176
    %v1178 = vmul.f32 %v1172, %v1177
    %v1179 = vmul.f32 %v1173, %v1177
    %1181 = vrot.lane.b32.xlu0 %v1177, 96
    %v1182 = vpop.permute.xlu0 %1181
    %v1184 = vadd.f32 %v1178, %v1182
    %v1185 = vadd.f32 %v1179, %v1182
    %v1186 = vlaneseq
    %v1187 = vshrl.u32 %v1186, 7
    %v1188 = vsub.s32 0, %v1187
    %v1189 = vrot.slane %v513, %v1188
    %1194 = vrot.lane.b32.xlu0 %v499, 96
    %v1195 = vpop.permute.xlu0 %1194
    %1196 = vrot.lane.b32.xlu0 %v500, 96
    %v1197 = vpop.permute.xlu0 %1196
    %1198 = vrot.lane.b32.xlu0 %v501, 96
    %v1199 = vpop.permute.xlu0 %1198
    %1200 = vrot.lane.b32.xlu0 %v502, 96
    %v1201 = vpop.permute.xlu0 %1200
    %v1207 = vsel %vm514, %v1184, 0
    %v1210 = vsel %vm514, %v1185, 0
    %1212 = vmatprep.subr.mxu0 0.0
    %1213 = vmatpush1.msra.mxu0 %v1195
    %1214 = vmatprep.subr.mxu0 0.0
    %1215 = vmatpush1.msra.mxu0 %v1197
    %1216 = vmatprep.subr.mxu0 0.0
    %1217 = vmatpush1.msra.mxu0 %v1199
    %1218 = vmatprep.subr.mxu0 0.0
    %1219 = vmatpush1.msra.mxu0 %v1201
    %1220 = vmatprep.subr.mxu0 0.0
    %1221 = vmatpush1.msra.mxu0 0.0
    %1222 = vmatprep.subr.mxu0 0.0
    %1223 = vmatpush1.msra.mxu0 0.0
    %1224 = vmatprep.subr.mxu0 0.0
    %1225 = vmatpush1.msra.mxu0 0.0
    %1226 = vmatprep.subr.mxu0 0.0
    %1227 = vmatpush1.msra.mxu0 0.0
    %1228 = vmatprep.subr.mxu0 0.0
    %1229 = vmatpush1.msra.mxu0 0.0
    %1230 = vmatprep.subr.mxu0 0.0
    %1231 = vmatpush1.msra.mxu0 0.0
    %1232 = vmatprep.subr.mxu0 0.0
    %1233 = vmatpush1.msra.mxu0 0.0
    %1234 = vmatprep.subr.mxu0 0.0
    %1235 = vmatpush1.msra.mxu0 0.0
    %1236 = vmatprep.subr.mxu0 0.0
    %1237 = vmatpush1.msra.mxu0 0.0
    %1238 = vmatprep.subr.mxu0 0.0
    %1239 = vmatpush1.msra.mxu0 0.0
    %1240 = vmatprep.subr.mxu0 0.0
    %1241 = vmatpush1.msra.mxu0 0.0
    %1242 = vmatprep.subr.mxu0 0.0
    %1243 = vmatpush1.msra.mxu0 0.0
    %1244 = vmatprep.subr.mxu0 0.0
    %1245 = vmatpush1.msra.mxu0 0.0
    %1246 = vmatprep.subr.mxu0 0.0
    %1247 = vmatpush1.msra.mxu0 0.0
    %1248 = vmatprep.subr.mxu0 0.0
    %1249 = vmatpush1.msra.mxu0 0.0
    %1250 = vmatprep.subr.mxu0 0.0
    %1251 = vmatpush1.msra.mxu0 0.0
    %1252 = vmatprep.subr.mxu0 0.0
    %1253 = vmatpush1.msra.mxu0 0.0
    %1254 = vmatprep.subr.mxu0 0.0
    %1255 = vmatpush1.msra.mxu0 0.0
    %1256 = vmatprep.subr.mxu0 0.0
    %1257 = vmatpush1.msra.mxu0 0.0
    %1258 = vmatprep.subr.mxu0 0.0
    %1259 = vmatpush1.msra.mxu0 0.0
    %1260 = vmatprep.subr.mxu0 0.0
    %1261 = vmatpush1.msra.mxu0 0.0
    %1262 = vmatprep.subr.mxu0 0.0
    %1263 = vmatpush1.msra.mxu0 0.0
    %1264 = vmatprep.subr.mxu0 0.0
    %1265 = vmatpush1.msra.mxu0 0.0
    %1266 = vmatprep.subr.mxu0 0.0
    %1267 = vmatpush1.msra.mxu0 0.0
    %1268 = vmatprep.subr.mxu0 0.0
    %1269 = vmatpush1.msra.mxu0 0.0
    %1270 = vmatprep.subr.mxu0 0.0
    %1271 = vmatpush1.msra.mxu0 0.0
    %1272 = vmatprep.subr.mxu0 0.0
    %1273 = vmatpush1.msra.mxu0 0.0
    %1274 = vmatprep.subr.mxu0 0.0
    %1275 = vmatpush1.msra.mxu0 0.0
    %1276 = vmatprep.mubr.f32.mxu0 0.0
    %1277 = vmatmul.mubr.f32.gmra.mrb[0].mxu0 %v1207
    %v1278 = vpop.f32.mrb[0].mxu0
    %v1279 = vadd.f32 %v1189, %v1278
    %v1280 = vpop.f32.mrb[0].mxu0
    %1281 = vmatprep.mubr.f32.mxu0 0.0
    %1282 = vmatmul.mubr.f32.gmra.mrb[0].mxu0 %v1210
    %v1283 = vpop.f32.mrb[0].mxu0
    %v1284 = vadd.f32 %v1189, %v1283
    %v1285 = vpop.f32.mrb[0].mxu0
    %1286 = vdwg.mxu0
    %v1287 = vmax.f32 %v1279, 0.0
    %v1288 = vmax.f32 %v1284, 0.0
    %1289 = vrot.lane.b32.xlu0 %v1177, 64
    %v1290 = vpop.permute.xlu0 %1289
    %vm1292 = vcmask 523264
    %v1294 = vsel %vm1292, %v1287, 0
    %v1297 = vsel %vm1292, %v1288, 0
    %1299 = vmatprep.subr.mxu0 0.0
    %1300 = vmatpush1.msra.mxu0 %v503
    %1301 = vmatprep.subr.mxu0 0.0
    %1302 = vmatpush1.msra.mxu0 %v504
    %1303 = vmatprep.subr.mxu0 0.0
    %1304 = vmatpush1.msra.mxu0 %v505
    %1305 = vmatprep.subr.mxu0 0.0
    %1306 = vmatpush1.msra.mxu0 %v506
    %1307 = vmatprep.subr.mxu0 0.0
    %1308 = vmatpush1.msra.mxu0 %v507
    %1309 = vmatprep.subr.mxu0 0.0
    %1310 = vmatpush1.msra.mxu0 %v508
    %1311 = vmatprep.subr.mxu0 0.0
    %1312 = vmatpush1.msra.mxu0 %v509
    %1313 = vmatprep.subr.mxu0 0.0
    %1314 = vmatpush1.msra.mxu0 %v510
    %1315 = vmatprep.subr.mxu0 0.0
    %1316 = vmatpush1.msra.mxu0 0.0
    %1317 = vmatprep.subr.mxu0 0.0
    %1318 = vmatpush1.msra.mxu0 0.0
    %1319 = vmatprep.subr.mxu0 0.0
    %1320 = vmatpush1.msra.mxu0 0.0
    %1321 = vmatprep.subr.mxu0 0.0
    %1322 = vmatpush1.msra.mxu0 0.0
    %1323 = vmatprep.subr.mxu0 0.0
    %1324 = vmatpush1.msra.mxu0 0.0
    %1325 = vmatprep.subr.mxu0 0.0
    %1326 = vmatpush1.msra.mxu0 0.0
    %1327 = vmatprep.subr.mxu0 0.0
    %1328 = vmatpush1.msra.mxu0 0.0
    %1329 = vmatprep.subr.mxu0 0.0
    %1330 = vmatpush1.msra.mxu0 0.0
    %1331 = vmatprep.subr.mxu0 0.0
    %1332 = vmatpush1.msra.mxu0 0.0
    %1333 = vmatprep.subr.mxu0 0.0
    %1334 = vmatpush1.msra.mxu0 0.0
    %1335 = vmatprep.subr.mxu0 0.0
    %1336 = vmatpush1.msra.mxu0 0.0
    %1337 = vmatprep.subr.mxu0 0.0
    %1338 = vmatpush1.msra.mxu0 0.0
    %1339 = vmatprep.subr.mxu0 0.0
    %1340 = vmatpush1.msra.mxu0 0.0
    %1341 = vmatprep.subr.mxu0 0.0
    %1342 = vmatpush1.msra.mxu0 0.0
    %1343 = vmatprep.subr.mxu0 0.0
    %1344 = vmatpush1.msra.mxu0 0.0
    %1345 = vmatprep.subr.mxu0 0.0
    %1346 = vmatpush1.msra.mxu0 0.0
    %1347 = vmatprep.subr.mxu0 0.0
    %1348 = vmatpush1.msra.mxu0 0.0
    %1349 = vmatprep.subr.mxu0 0.0
    %1350 = vmatpush1.msra.mxu0 0.0
    %1351 = vmatprep.subr.mxu0 0.0
    %1352 = vmatpush1.msra.mxu0 0.0
    %1353 = vmatprep.subr.mxu0 0.0
    %1354 = vmatpush1.msra.mxu0 0.0
    %1355 = vmatprep.subr.mxu0 0.0
    %1356 = vmatpush1.msra.mxu0 0.0
    %1357 = vmatprep.subr.mxu0 0.0
    %1358 = vmatpush1.msra.mxu0 0.0
    %1359 = vmatprep.subr.mxu0 0.0
    %1360 = vmatpush1.msra.mxu0 0.0
    %1361 = vmatprep.subr.mxu0 0.0
    %1362 = vmatpush1.msra.mxu0 0.0
    %1363 = vmatprep.mubr.f32.mxu0 0.0
    %1364 = vmatmul.mubr.f32.gmra.mrb[0].mxu0 %v1294
    %v1365 = vpop.f32.mrb[0].mxu0
    %v1366 = vadd.f32 %v1290, %v1365
    %v1367 = vpop.f32.mrb[0].mxu0
    %1368 = vmatprep.mubr.f32.mxu0 0.0
    %1369 = vmatmul.mubr.f32.gmra.mrb[0].mxu0 %v1297
    %v1370 = vpop.f32.mrb[0].mxu0
    %v1371 = vadd.f32 %v1290, %v1370
    %v1372 = vpop.f32.mrb[0].mxu0
    %1373 = vdwg.mxu0
    %v1374 = vadd.f32 %v1146, %v1366
    %v1375 = vadd.f32 %v1147, %v1371
    %v1376 = vmul.f32 %v1374, %v1140
    %v1377 = vmul.f32 %v1375, %v1144
    %s1378 = scalar_lea.vmem %s2, 136
    %v1379 = vld [vmem:[%s1378] sm:$0xff]
    %v1380 = vld [vmem:[%s1378 + $0x8] sm:$0xff]
    %v1381 = vld [vmem:[%s1378 + $0x10] sm:$0xff]
    %v1382 = vld [vmem:[%s1378 + $0x18] sm:$0xff]
    %v1383 = vld [vmem:[%s1378 + $0x20] sm:$0xff]
    %v1384 = vld [vmem:[%s1378 + $0x28] sm:$0xff]
    %v1385 = vld [vmem:[%s1378 + $0x30] sm:$0xff]
    %v1386 = vld [vmem:[%s1378 + $0x38] sm:$0xff]
    %v1387 = vld [vmem:[%s1378 + $0x40] sm:$0xff]
    %v1388 = vld [vmem:[%s1378 + $0x48] sm:$0xff]
    %v1389 = vld [vmem:[%s1378 + $0x50] sm:$0xff]
    %v1390 = vld [vmem:[%s1378 + $0x58] sm:$0xff]
    %v1391 = vld [vmem:[%s1378 + $0x60] sm:$0xff]
    %v1392 = vld [vmem:[%s1378 + $0x68] sm:$0xff]
    %v1393 = vld [vmem:[%s1378 + $0x70] sm:$0xff]
    %v1394 = vld [vmem:[%s1378 + $0x78] sm:$0xff]
    %v1395 = vld [vmem:[%s1378 + $0x80] sm:$0x1]
    %v1396 = vld [vmem:[%s1378 + $0x81] sm:$0x1]
    %v1397 = vld [vmem:[%s1378 + $0x82] sm:$0x1]
    %v1398 = vsel %vm514, %v1376, 0.0
    %1399 = vadd.xlane.f32.xlu0 %v1398
    %v1400 = vpop.xlane.xlu0 %1399
    %v1401 = vsel %vm514, %v1377, 0.0
    %1402 = vadd.xlane.f32.xlu0 %v1401
    %v1403 = vpop.xlane.xlu0 %1402
    %v1404 = vmul.f32 %v1400, %v521
    %v1405 = vmul.f32 %v1403, %v521
    %v1406 = vsub.f32 %v1376, %v1404
    %v1407 = vsub.f32 %v1377, %v1405
    %v1408 = vmul.f32 %v1406, %v1406
    %v1409 = vmul.f32 %v1407, %v1407
    %v1410 = vsel %vm514, %v1408, 0.0
    %1411 = vadd.xlane.f32.xlu0 %v1410
    %v1412 = vpop.xlane.xlu0 %1411
    %v1413 = vsel %vm514, %v1409, 0.0
    %1414 = vadd.xlane.f32.xlu0 %v1413
    %v1415 = vpop.xlane.xlu0 %1414
    %v1416 = vmul.f32 %v1412, %v521
    %v1417 = vmul.f32 %v1415, %v521
    %v1418 = vadd.f32 %v1416, 1e-05
    %v1419 = vadd.f32 %v1417, 1e-05
    %v1420 = vrsqrt.pop %v1418
    %v1421 = vrsqrt.pop %v1419
    %v1422 = vmul.f32 %v1406, %v1420
    %v1423 = vmul.f32 %v1407, %v1421
    %v1424 = vlaneseq
    %v1425 = vshrl.u32 %v1424, 7
    %v1426 = vsub.s32 0, %v1425
    %v1427 = vrot.slane %v1395, %v1426
    %v1428 = vmul.f32 %v1422, %v1427
    %v1429 = vmul.f32 %v1423, %v1427
    %1431 = vrot.lane.b32.xlu0 %v1427, 96
    %v1432 = vpop.permute.xlu0 %1431
    %v1434 = vadd.f32 %v1428, %v1432
    %v1435 = vadd.f32 %v1429, %v1432
    %v1437 = vsel %vm514, %v1434, 0
    %v1440 = vsel %vm514, %v1435, 0
    %1442 = vmatprep.subr.mxu0 0.0
    %1443 = vmatpush1.msra.mxu0 %v1379
    %1444 = vmatprep.subr.mxu0 0.0
    %1445 = vmatpush1.msra.mxu0 %v1380
    %1446 = vmatprep.subr.mxu0 0.0
    %1447 = vmatpush1.msra.mxu0 %v1381
    %1448 = vmatprep.subr.mxu0 0.0
    %1449 = vmatpush1.msra.mxu0 %v1382
    %1450 = vmatprep.subr.mxu0 0.0
    %1451 = vmatpush1.msra.mxu0 0.0
    %1452 = vmatprep.subr.mxu0 0.0
    %1453 = vmatpush1.msra.mxu0 0.0
    %1454 = vmatprep.subr.mxu0 0.0
    %1455 = vmatpush1.msra.mxu0 0.0
    %1456 = vmatprep.subr.mxu0 0.0
    %1457 = vmatpush1.msra.mxu0 0.0
    %1458 = vmatprep.subr.mxu0 0.0
    %1459 = vmatpush1.msra.mxu0 0.0
    %1460 = vmatprep.subr.mxu0 0.0
    %1461 = vmatpush1.msra.mxu0 0.0
    %1462 = vmatprep.subr.mxu0 0.0
    %1463 = vmatpush1.msra.mxu0 0.0
    %1464 = vmatprep.subr.mxu0 0.0
    %1465 = vmatpush1.msra.mxu0 0.0
    %1466 = vmatprep.subr.mxu0 0.0
    %1467 = vmatpush1.msra.mxu0 0.0
    %1468 = vmatprep.subr.mxu0 0.0
    %1469 = vmatpush1.msra.mxu0 0.0
    %1470 = vmatprep.subr.mxu0 0.0
    %1471 = vmatpush1.msra.mxu0 0.0
    %1472 = vmatprep.subr.mxu0 0.0
    %1473 = vmatpush1.msra.mxu0 0.0
    %1474 = vmatprep.subr.mxu0 0.0
    %1475 = vmatpush1.msra.mxu0 0.0
    %1476 = vmatprep.subr.mxu0 0.0
    %1477 = vmatpush1.msra.mxu0 0.0
    %1478 = vmatprep.subr.mxu0 0.0
    %1479 = vmatpush1.msra.mxu0 0.0
    %1480 = vmatprep.subr.mxu0 0.0
    %1481 = vmatpush1.msra.mxu0 0.0
    %1482 = vmatprep.subr.mxu0 0.0
    %1483 = vmatpush1.msra.mxu0 0.0
    %1484 = vmatprep.subr.mxu0 0.0
    %1485 = vmatpush1.msra.mxu0 0.0
    %1486 = vmatprep.subr.mxu0 0.0
    %1487 = vmatpush1.msra.mxu0 0.0
    %1488 = vmatprep.subr.mxu0 0.0
    %1489 = vmatpush1.msra.mxu0 0.0
    %1490 = vmatprep.subr.mxu0 0.0
    %1491 = vmatpush1.msra.mxu0 0.0
    %1492 = vmatprep.subr.mxu0 0.0
    %1493 = vmatpush1.msra.mxu0 0.0
    %1494 = vmatprep.subr.mxu0 0.0
    %1495 = vmatpush1.msra.mxu0 0.0
    %1496 = vmatprep.subr.mxu0 0.0
    %1497 = vmatpush1.msra.mxu0 0.0
    %1498 = vmatprep.subr.mxu0 0.0
    %1499 = vmatpush1.msra.mxu0 0.0
    %1500 = vmatprep.subr.mxu0 0.0
    %1501 = vmatpush1.msra.mxu0 0.0
    %1502 = vmatprep.subr.mxu0 0.0
    %1503 = vmatpush1.msra.mxu0 0.0
    %1504 = vmatprep.subr.mxu0 0.0
    %1505 = vmatpush1.msra.mxu0 0.0
    %1506 = vmatprep.mubr.f32.mxu0 0.0
    %1507 = vmatmul.mubr.f32.gmra.mrb[0].mxu0 %v1437
    %v1508 = vpop.f32.mrb[0].mxu0
    %v1509 = vadd.f32 0.0, %v1508
    %v1510 = vpop.f32.mrb[0].mxu0
    %1511 = vmatprep.mubr.f32.mxu0 0.0
    %1512 = vmatmul.mubr.f32.gmra.mrb[0].mxu0 %v1440
    %v1513 = vpop.f32.mrb[0].mxu0
    %v1514 = vadd.f32 0.0, %v1513
    %v1515 = vpop.f32.mrb[0].mxu0
    %1516 = vdwg.mxu0
    %1519 = vrot.lane.b32.xlu0 %v1509, 96
    %v1520 = vpop.permute.xlu0 %1519
    %1521 = vrot.lane.b32.xlu0 %v1514, 96
    %v1522 = vpop.permute.xlu0 %1521
    %v1523 = vsel %vm641, %v1509, 0
    %v1525 = vsel %vm641, %v1514, 0
    %v1527 = vsel %vm641, %v1520, 0
    %v1529 = vsel %vm641, %v1522, 0
    %1531 = vmatprep.subr.mxu0 0.0
    %1532 = vmatpush1.xpose.msra.mxu0 %v1527
    %1533 = vmatprep.subr.mxu0 0.0
    %1534 = vmatpush1.xpose.msra.mxu0 %v1529
    %1535 = vmatprep.subr.mxu0 0.0
    %1536 = vmatpush1.xpose.msra.mxu0 0.0
    %1537 = vmatprep.subr.mxu0 0.0
    %1538 = vmatpush1.xpose.msra.mxu0 0.0
    %1539 = vmatprep.subr.mxu0 0.0
    %1540 = vmatpush1.xpose.msra.mxu0 0.0
    %1541 = vmatprep.subr.mxu0 0.0
    %1542 = vmatpush1.xpose.msra.mxu0 0.0
    %1543 = vmatprep.subr.mxu0 0.0
    %1544 = vmatpush1.xpose.msra.mxu0 0.0
    %1545 = vmatprep.subr.mxu0 0.0
    %1546 = vmatpush1.xpose.msra.mxu0 0.0
    %1547 = vmatprep.subr.mxu0 0.0
    %1548 = vmatpush1.xpose.msra.mxu0 0.0
    %1549 = vmatprep.subr.mxu0 0.0
    %1550 = vmatpush1.xpose.msra.mxu0 0.0
    %1551 = vmatprep.subr.mxu0 0.0
    %1552 = vmatpush1.xpose.msra.mxu0 0.0
    %1553 = vmatprep.subr.mxu0 0.0
    %1554 = vmatpush1.xpose.msra.mxu0 0.0
    %1555 = vmatprep.subr.mxu0 0.0
    %1556 = vmatpush1.xpose.msra.mxu0 0.0
    %1557 = vmatprep.subr.mxu0 0.0
    %1558 = vmatpush1.xpose.msra.mxu0 0.0
    %1559 = vmatprep.subr.mxu0 0.0
    %1560 = vmatpush1.xpose.msra.mxu0 0.0
    %1561 = vmatprep.subr.mxu0 0.0
    %1562 = vmatpush1.xpose.msra.mxu0 0.0
    %1563 = vmatprep.subr.mxu0 0.0
    %1564 = vmatpush1.xpose.msra.mxu0 0.0
    %1565 = vmatprep.subr.mxu0 0.0
    %1566 = vmatpush1.xpose.msra.mxu0 0.0
    %1567 = vmatprep.subr.mxu0 0.0
    %1568 = vmatpush1.xpose.msra.mxu0 0.0
    %1569 = vmatprep.subr.mxu0 0.0
    %1570 = vmatpush1.xpose.msra.mxu0 0.0
    %1571 = vmatprep.subr.mxu0 0.0
    %1572 = vmatpush1.xpose.msra.mxu0 0.0
    %1573 = vmatprep.subr.mxu0 0.0
    %1574 = vmatpush1.xpose.msra.mxu0 0.0
    %1575 = vmatprep.subr.mxu0 0.0
    %1576 = vmatpush1.xpose.msra.mxu0 0.0
    %1577 = vmatprep.subr.mxu0 0.0
    %1578 = vmatpush1.xpose.msra.mxu0 0.0
    %1579 = vmatprep.subr.mxu0 0.0
    %1580 = vmatpush1.xpose.msra.mxu0 0.0
    %1581 = vmatprep.subr.mxu0 0.0
    %1582 = vmatpush1.xpose.msra.mxu0 0.0
    %1583 = vmatprep.subr.mxu0 0.0
    %1584 = vmatpush1.xpose.msra.mxu0 0.0
    %1585 = vmatprep.subr.mxu0 0.0
    %1586 = vmatpush1.xpose.msra.mxu0 0.0
    %1587 = vmatprep.subr.mxu0 0.0
    %1588 = vmatpush1.xpose.msra.mxu0 0.0
    %1589 = vmatprep.subr.mxu0 0.0
    %1590 = vmatpush1.xpose.msra.mxu0 0.0
    %1591 = vmatprep.subr.mxu0 0.0
    %1592 = vmatpush1.xpose.msra.mxu0 0.0
    %1593 = vmatprep.subr.mxu0 0.0
    %1594 = vmatpush1.xpose.msra.mxu0 0.0
    %1595 = vmatprep.mubr.f32.mxu0 0.0
    %1596 = vmatmul.mubr.f32.gmra.mrb[0].mxu0 %v1523
    %v1597 = vpop.f32.mrb[0].mxu0
    %v1598 = vadd.f32 0.0, %v1597
    %v1599 = vpop.f32.mrb[0].mxu0
    %1600 = vmatprep.mubr.f32.mxu0 0.0
    %1601 = vmatmul.mubr.f32.gmra.mrb[0].mxu0 %v1525
    %v1602 = vpop.f32.mrb[0].mxu0
    %v1603 = vadd.f32 0.0, %v1602
    %v1604 = vpop.f32.mrb[0].mxu0
    %1605 = vdwg.mxu0
    %v1606 = vmul.f32 %v1598, 0.25
    %v1607 = vmul.f32 %v1603, 0.25
    %v1608 = vsel %vm493, -1e+09, %v1606
    %v1609 = vsel %vm494, -1e+09, %v1607
    %v1610 = vsel %vm641, %v1608, -inf
    %1611 = vmax.xlane.f32.xlu0 %v1610
    %v1612 = vpop.xlane.xlu0 %1611
    %v1613 = vsel %vm641, %v1609, -inf
    %1614 = vmax.xlane.f32.xlu0 %v1613
    %v1615 = vpop.xlane.xlu0 %1614
    %v1616 = vsub.f32 %v1608, %v1612
    %v1617 = vsub.f32 %v1609, %v1615
    %v1618 = vmul.f32 %v1616, 1.442695
    %v1619 = vpow.pop %v1618
    %v1620 = vmul.f32 %v1617, 1.442695
    %v1621 = vpow.pop %v1620
    %v1622 = vsel %vm641, %v1619, 0.0
    %1623 = vadd.xlane.f32.xlu0 %v1622
    %v1624 = vpop.xlane.xlu0 %1623
    %v1625 = vsel %vm641, %v1621, 0.0
    %1626 = vadd.xlane.f32.xlu0 %v1625
    %v1627 = vpop.xlane.xlu0 %1626
    %v1628 = vrcp.pop %v1624
    %v1629 = vmul.f32 %v1619, %v1628
    %v1630 = vrcp.pop %v1627
    %v1631 = vmul.f32 %v1621, %v1630
    %1632 = vrot.lane.b32.xlu0 %v1509, 64
    %v1633 = vpop.permute.xlu0 %1632
    %1634 = vrot.lane.b32.xlu0 %v1514, 64
    %v1635 = vpop.permute.xlu0 %1634
    %v1639 = vsel %vm641, %v1629, 0
    %v1642 = vsel %vm641, %v1631, 0
    %1644 = vmatprep.subr.mxu0 0.0
    %1645 = vmatpush1.msra.mxu0 %v1633
    %1646 = vmatprep.subr.mxu0 0.0
    %1647 = vmatpush1.msra.mxu0 %v1635
    %1648 = vmatprep.subr.mxu0 0.0
    %1649 = vmatpush1.msra.mxu0 0.0
    %1650 = vmatprep.subr.mxu0 0.0
    %1651 = vmatpush1.msra.mxu0 0.0
    %1652 = vmatprep.subr.mxu0 0.0
    %1653 = vmatpush1.msra.mxu0 0.0
    %1654 = vmatprep.subr.mxu0 0.0
    %1655 = vmatpush1.msra.mxu0 0.0
    %1656 = vmatprep.subr.mxu0 0.0
    %1657 = vmatpush1.msra.mxu0 0.0
    %1658 = vmatprep.subr.mxu0 0.0
    %1659 = vmatpush1.msra.mxu0 0.0
    %1660 = vmatprep.subr.mxu0 0.0
    %1661 = vmatpush1.msra.mxu0 0.0
    %1662 = vmatprep.subr.mxu0 0.0
    %1663 = vmatpush1.msra.mxu0 0.0
    %1664 = vmatprep.subr.mxu0 0.0
    %1665 = vmatpush1.msra.mxu0 0.0
    %1666 = vmatprep.subr.mxu0 0.0
    %1667 = vmatpush1.msra.mxu0 0.0
    %1668 = vmatprep.subr.mxu0 0.0
    %1669 = vmatpush1.msra.mxu0 0.0
    %1670 = vmatprep.subr.mxu0 0.0
    %1671 = vmatpush1.msra.mxu0 0.0
    %1672 = vmatprep.subr.mxu0 0.0
    %1673 = vmatpush1.msra.mxu0 0.0
    %1674 = vmatprep.subr.mxu0 0.0
    %1675 = vmatpush1.msra.mxu0 0.0
    %1676 = vmatprep.subr.mxu0 0.0
    %1677 = vmatpush1.msra.mxu0 0.0
    %1678 = vmatprep.subr.mxu0 0.0
    %1679 = vmatpush1.msra.mxu0 0.0
    %1680 = vmatprep.subr.mxu0 0.0
    %1681 = vmatpush1.msra.mxu0 0.0
    %1682 = vmatprep.subr.mxu0 0.0
    %1683 = vmatpush1.msra.mxu0 0.0
    %1684 = vmatprep.subr.mxu0 0.0
    %1685 = vmatpush1.msra.mxu0 0.0
    %1686 = vmatprep.subr.mxu0 0.0
    %1687 = vmatpush1.msra.mxu0 0.0
    %1688 = vmatprep.subr.mxu0 0.0
    %1689 = vmatpush1.msra.mxu0 0.0
    %1690 = vmatprep.subr.mxu0 0.0
    %1691 = vmatpush1.msra.mxu0 0.0
    %1692 = vmatprep.subr.mxu0 0.0
    %1693 = vmatpush1.msra.mxu0 0.0
    %1694 = vmatprep.subr.mxu0 0.0
    %1695 = vmatpush1.msra.mxu0 0.0
    %1696 = vmatprep.subr.mxu0 0.0
    %1697 = vmatpush1.msra.mxu0 0.0
    %1698 = vmatprep.subr.mxu0 0.0
    %1699 = vmatpush1.msra.mxu0 0.0
    %1700 = vmatprep.subr.mxu0 0.0
    %1701 = vmatpush1.msra.mxu0 0.0
    %1702 = vmatprep.subr.mxu0 0.0
    %1703 = vmatpush1.msra.mxu0 0.0
    %1704 = vmatprep.subr.mxu0 0.0
    %1705 = vmatpush1.msra.mxu0 0.0
    %1706 = vmatprep.subr.mxu0 0.0
    %1707 = vmatpush1.msra.mxu0 0.0
    %1708 = vmatprep.mubr.f32.mxu0 0.0
    %1709 = vmatmul.mubr.f32.gmra.mrb[0].mxu0 %v1639
    %v1710 = vpop.f32.mrb[0].mxu0
    %v1711 = vadd.f32 0.0, %v1710
    %v1712 = vpop.f32.mrb[0].mxu0
    %1713 = vmatprep.mubr.f32.mxu0 0.0
    %1714 = vmatmul.mubr.f32.gmra.mrb[0].mxu0 %v1642
    %v1715 = vpop.f32.mrb[0].mxu0
    %v1716 = vadd.f32 0.0, %v1715
    %v1717 = vpop.f32.mrb[0].mxu0
    %1718 = vdwg.mxu0
    %1719 = vrot.lane.b32.xlu0 %v1509, 112
    %v1720 = vpop.permute.xlu0 %1719
    %1721 = vrot.lane.b32.xlu0 %v1514, 112
    %v1722 = vpop.permute.xlu0 %1721
    %1723 = vrot.lane.b32.xlu0 %v1509, 80
    %v1724 = vpop.permute.xlu0 %1723
    %1725 = vrot.lane.b32.xlu0 %v1514, 80
    %v1726 = vpop.permute.xlu0 %1725
    %v1727 = vsel %vm641, %v1720, 0
    %v1729 = vsel %vm641, %v1722, 0
    %v1731 = vsel %vm641, %v1724, 0
    %v1733 = vsel %vm641, %v1726, 0
    %1735 = vmatprep.subr.mxu0 0.0
    %1736 = vmatpush1.xpose.msra.mxu0 %v1731
    %1737 = vmatprep.subr.mxu0 0.0
    %1738 = vmatpush1.xpose.msra.mxu0 %v1733
    %1739 = vmatprep.subr.mxu0 0.0
    %1740 = vmatpush1.xpose.msra.mxu0 0.0
    %1741 = vmatprep.subr.mxu0 0.0
    %1742 = vmatpush1.xpose.msra.mxu0 0.0
    %1743 = vmatprep.subr.mxu0 0.0
    %1744 = vmatpush1.xpose.msra.mxu0 0.0
    %1745 = vmatprep.subr.mxu0 0.0
    %1746 = vmatpush1.xpose.msra.mxu0 0.0
    %1747 = vmatprep.subr.mxu0 0.0
    %1748 = vmatpush1.xpose.msra.mxu0 0.0
    %1749 = vmatprep.subr.mxu0 0.0
    %1750 = vmatpush1.xpose.msra.mxu0 0.0
    %1751 = vmatprep.subr.mxu0 0.0
    %1752 = vmatpush1.xpose.msra.mxu0 0.0
    %1753 = vmatprep.subr.mxu0 0.0
    %1754 = vmatpush1.xpose.msra.mxu0 0.0
    %1755 = vmatprep.subr.mxu0 0.0
    %1756 = vmatpush1.xpose.msra.mxu0 0.0
    %1757 = vmatprep.subr.mxu0 0.0
    %1758 = vmatpush1.xpose.msra.mxu0 0.0
    %1759 = vmatprep.subr.mxu0 0.0
    %1760 = vmatpush1.xpose.msra.mxu0 0.0
    %1761 = vmatprep.subr.mxu0 0.0
    %1762 = vmatpush1.xpose.msra.mxu0 0.0
    %1763 = vmatprep.subr.mxu0 0.0
    %1764 = vmatpush1.xpose.msra.mxu0 0.0
    %1765 = vmatprep.subr.mxu0 0.0
    %1766 = vmatpush1.xpose.msra.mxu0 0.0
    %1767 = vmatprep.subr.mxu0 0.0
    %1768 = vmatpush1.xpose.msra.mxu0 0.0
    %1769 = vmatprep.subr.mxu0 0.0
    %1770 = vmatpush1.xpose.msra.mxu0 0.0
    %1771 = vmatprep.subr.mxu0 0.0
    %1772 = vmatpush1.xpose.msra.mxu0 0.0
    %1773 = vmatprep.subr.mxu0 0.0
    %1774 = vmatpush1.xpose.msra.mxu0 0.0
    %1775 = vmatprep.subr.mxu0 0.0
    %1776 = vmatpush1.xpose.msra.mxu0 0.0
    %1777 = vmatprep.subr.mxu0 0.0
    %1778 = vmatpush1.xpose.msra.mxu0 0.0
    %1779 = vmatprep.subr.mxu0 0.0
    %1780 = vmatpush1.xpose.msra.mxu0 0.0
    %1781 = vmatprep.subr.mxu0 0.0
    %1782 = vmatpush1.xpose.msra.mxu0 0.0
    %1783 = vmatprep.subr.mxu0 0.0
    %1784 = vmatpush1.xpose.msra.mxu0 0.0
    %1785 = vmatprep.subr.mxu0 0.0
    %1786 = vmatpush1.xpose.msra.mxu0 0.0
    %1787 = vmatprep.subr.mxu0 0.0
    %1788 = vmatpush1.xpose.msra.mxu0 0.0
    %1789 = vmatprep.subr.mxu0 0.0
    %1790 = vmatpush1.xpose.msra.mxu0 0.0
    %1791 = vmatprep.subr.mxu0 0.0
    %1792 = vmatpush1.xpose.msra.mxu0 0.0
    %1793 = vmatprep.subr.mxu0 0.0
    %1794 = vmatpush1.xpose.msra.mxu0 0.0
    %1795 = vmatprep.subr.mxu0 0.0
    %1796 = vmatpush1.xpose.msra.mxu0 0.0
    %1797 = vmatprep.subr.mxu0 0.0
    %1798 = vmatpush1.xpose.msra.mxu0 0.0
    %1799 = vmatprep.mubr.f32.mxu0 0.0
    %1800 = vmatmul.mubr.f32.gmra.mrb[0].mxu0 %v1727
    %v1801 = vpop.f32.mrb[0].mxu0
    %v1802 = vadd.f32 0.0, %v1801
    %v1803 = vpop.f32.mrb[0].mxu0
    %1804 = vmatprep.mubr.f32.mxu0 0.0
    %1805 = vmatmul.mubr.f32.gmra.mrb[0].mxu0 %v1729
    %v1806 = vpop.f32.mrb[0].mxu0
    %v1807 = vadd.f32 0.0, %v1806
    %v1808 = vpop.f32.mrb[0].mxu0
    %1809 = vdwg.mxu0
    %v1810 = vmul.f32 %v1802, 0.25
    %v1811 = vmul.f32 %v1807, 0.25
    %v1812 = vsel %vm493, -1e+09, %v1810
    %v1813 = vsel %vm494, -1e+09, %v1811
    %v1814 = vsel %vm641, %v1812, -inf
    %1815 = vmax.xlane.f32.xlu0 %v1814
    %v1816 = vpop.xlane.xlu0 %1815
    %v1817 = vsel %vm641, %v1813, -inf
    %1818 = vmax.xlane.f32.xlu0 %v1817
    %v1819 = vpop.xlane.xlu0 %1818
    %v1820 = vsub.f32 %v1812, %v1816
    %v1821 = vsub.f32 %v1813, %v1819
    %v1822 = vmul.f32 %v1820, 1.442695
    %v1823 = vpow.pop %v1822
    %v1824 = vmul.f32 %v1821, 1.442695
    %v1825 = vpow.pop %v1824
    %v1826 = vsel %vm641, %v1823, 0.0
    %1827 = vadd.xlane.f32.xlu0 %v1826
    %v1828 = vpop.xlane.xlu0 %1827
    %v1829 = vsel %vm641, %v1825, 0.0
    %1830 = vadd.xlane.f32.xlu0 %v1829
    %v1831 = vpop.xlane.xlu0 %1830
    %v1832 = vrcp.pop %v1828
    %v1833 = vmul.f32 %v1823, %v1832
    %v1834 = vrcp.pop %v1831
    %v1835 = vmul.f32 %v1825, %v1834
    %1836 = vrot.lane.b32.xlu0 %v1509, 48
    %v1837 = vpop.permute.xlu0 %1836
    %1838 = vrot.lane.b32.xlu0 %v1514, 48
    %v1839 = vpop.permute.xlu0 %1838
    %v1843 = vsel %vm641, %v1833, 0
    %v1846 = vsel %vm641, %v1835, 0
    %1848 = vmatprep.subr.mxu0 0.0
    %1849 = vmatpush1.msra.mxu0 %v1837
    %1850 = vmatprep.subr.mxu0 0.0
    %1851 = vmatpush1.msra.mxu0 %v1839
    %1852 = vmatprep.subr.mxu0 0.0
    %1853 = vmatpush1.msra.mxu0 0.0
    %1854 = vmatprep.subr.mxu0 0.0
    %1855 = vmatpush1.msra.mxu0 0.0
    %1856 = vmatprep.subr.mxu0 0.0
    %1857 = vmatpush1.msra.mxu0 0.0
    %1858 = vmatprep.subr.mxu0 0.0
    %1859 = vmatpush1.msra.mxu0 0.0
    %1860 = vmatprep.subr.mxu0 0.0
    %1861 = vmatpush1.msra.mxu0 0.0
    %1862 = vmatprep.subr.mxu0 0.0
    %1863 = vmatpush1.msra.mxu0 0.0
    %1864 = vmatprep.subr.mxu0 0.0
    %1865 = vmatpush1.msra.mxu0 0.0
    %1866 = vmatprep.subr.mxu0 0.0
    %1867 = vmatpush1.msra.mxu0 0.0
    %1868 = vmatprep.subr.mxu0 0.0
    %1869 = vmatpush1.msra.mxu0 0.0
    %1870 = vmatprep.subr.mxu0 0.0
    %1871 = vmatpush1.msra.mxu0 0.0
    %1872 = vmatprep.subr.mxu0 0.0
    %1873 = vmatpush1.msra.mxu0 0.0
    %1874 = vmatprep.subr.mxu0 0.0
    %1875 = vmatpush1.msra.mxu0 0.0
    %1876 = vmatprep.subr.mxu0 0.0
    %1877 = vmatpush1.msra.mxu0 0.0
    %1878 = vmatprep.subr.mxu0 0.0
    %1879 = vmatpush1.msra.mxu0 0.0
    %1880 = vmatprep.subr.mxu0 0.0
    %1881 = vmatpush1.msra.mxu0 0.0
    %1882 = vmatprep.subr.mxu0 0.0
    %1883 = vmatpush1.msra.mxu0 0.0
    %1884 = vmatprep.subr.mxu0 0.0
    %1885 = vmatpush1.msra.mxu0 0.0
    %1886 = vmatprep.subr.mxu0 0.0
    %1887 = vmatpush1.msra.mxu0 0.0
    %1888 = vmatprep.subr.mxu0 0.0
    %1889 = vmatpush1.msra.mxu0 0.0
    %1890 = vmatprep.subr.mxu0 0.0
    %1891 = vmatpush1.msra.mxu0 0.0
    %1892 = vmatprep.subr.mxu0 0.0
    %1893 = vmatpush1.msra.mxu0 0.0
    %1894 = vmatprep.subr.mxu0 0.0
    %1895 = vmatpush1.msra.mxu0 0.0
    %1896 = vmatprep.subr.mxu0 0.0
    %1897 = vmatpush1.msra.mxu0 0.0
    %1898 = vmatprep.subr.mxu0 0.0
    %1899 = vmatpush1.msra.mxu0 0.0
    %1900 = vmatprep.subr.mxu0 0.0
    %1901 = vmatpush1.msra.mxu0 0.0
    %1902 = vmatprep.subr.mxu0 0.0
    %1903 = vmatpush1.msra.mxu0 0.0
    %1904 = vmatprep.subr.mxu0 0.0
    %1905 = vmatpush1.msra.mxu0 0.0
    %1906 = vmatprep.subr.mxu0 0.0
    %1907 = vmatpush1.msra.mxu0 0.0
    %1908 = vmatprep.subr.mxu0 0.0
    %1909 = vmatpush1.msra.mxu0 0.0
    %1910 = vmatprep.subr.mxu0 0.0
    %1911 = vmatpush1.msra.mxu0 0.0
    %1912 = vmatprep.mubr.f32.mxu0 0.0
    %1913 = vmatmul.mubr.f32.gmra.mrb[0].mxu0 %v1843
    %v1914 = vpop.f32.mrb[0].mxu0
    %v1915 = vadd.f32 0.0, %v1914
    %v1916 = vpop.f32.mrb[0].mxu0
    %1917 = vmatprep.mubr.f32.mxu0 0.0
    %1918 = vmatmul.mubr.f32.gmra.mrb[0].mxu0 %v1846
    %v1919 = vpop.f32.mrb[0].mxu0
    %v1920 = vadd.f32 0.0, %v1919
    %v1921 = vpop.f32.mrb[0].mxu0
    %1922 = vdwg.mxu0
    %1925 = vrot.lane.b32.xlu0 %v1915, 16
    %v1926 = vpop.permute.xlu0 %1925
    %1927 = vrot.lane.b32.xlu0 %v1920, 16
    %v1928 = vpop.permute.xlu0 %1927
    %v1931 = vsel %vm641, %v1711, %v1926
    %v1932 = vsel %vm641, %v1716, %v1928
    %1933 = vrot.lane.b32.xlu0 %v1427, 64
    %v1934 = vpop.permute.xlu0 %1933
    %v1937 = vsel %vm514, %v1931, 0
    %v1940 = vsel %vm514, %v1932, 0
    %1942 = vmatprep.subr.mxu0 0.0
    %1943 = vmatpush1.msra.mxu0 %v1383
    %1944 = vmatprep.subr.mxu0 0.0
    %1945 = vmatpush1.msra.mxu0 %v1384
    %1946 = vmatprep.subr.mxu0 0.0
    %1947 = vmatpush1.msra.mxu0 %v1385
    %1948 = vmatprep.subr.mxu0 0.0
    %1949 = vmatpush1.msra.mxu0 %v1386
    %1950 = vmatprep.subr.mxu0 0.0
    %1951 = vmatpush1.msra.mxu0 0.0
    %1952 = vmatprep.subr.mxu0 0.0
    %1953 = vmatpush1.msra.mxu0 0.0
    %1954 = vmatprep.subr.mxu0 0.0
    %1955 = vmatpush1.msra.mxu0 0.0
    %1956 = vmatprep.subr.mxu0 0.0
    %1957 = vmatpush1.msra.mxu0 0.0
    %1958 = vmatprep.subr.mxu0 0.0
    %1959 = vmatpush1.msra.mxu0 0.0
    %1960 = vmatprep.subr.mxu0 0.0
    %1961 = vmatpush1.msra.mxu0 0.0
    %1962 = vmatprep.subr.mxu0 0.0
    %1963 = vmatpush1.msra.mxu0 0.0
    %1964 = vmatprep.subr.mxu0 0.0
    %1965 = vmatpush1.msra.mxu0 0.0
    %1966 = vmatprep.subr.mxu0 0.0
    %1967 = vmatpush1.msra.mxu0 0.0
    %1968 = vmatprep.subr.mxu0 0.0
    %1969 = vmatpush1.msra.mxu0 0.0
    %1970 = vmatprep.subr.mxu0 0.0
    %1971 = vmatpush1.msra.mxu0 0.0
    %1972 = vmatprep.subr.mxu0 0.0
    %1973 = vmatpush1.msra.mxu0 0.0
    %1974 = vmatprep.subr.mxu0 0.0
    %1975 = vmatpush1.msra.mxu0 0.0
    %1976 = vmatprep.subr.mxu0 0.0
    %1977 = vmatpush1.msra.mxu0 0.0
    %1978 = vmatprep.subr.mxu0 0.0
    %1979 = vmatpush1.msra.mxu0 0.0
    %1980 = vmatprep.subr.mxu0 0.0
    %1981 = vmatpush1.msra.mxu0 0.0
    %1982 = vmatprep.subr.mxu0 0.0
    %1983 = vmatpush1.msra.mxu0 0.0
    %1984 = vmatprep.subr.mxu0 0.0
    %1985 = vmatpush1.msra.mxu0 0.0
    %1986 = vmatprep.subr.mxu0 0.0
    %1987 = vmatpush1.msra.mxu0 0.0
    %1988 = vmatprep.subr.mxu0 0.0
    %1989 = vmatpush1.msra.mxu0 0.0
    %1990 = vmatprep.subr.mxu0 0.0
    %1991 = vmatpush1.msra.mxu0 0.0
    %1992 = vmatprep.subr.mxu0 0.0
    %1993 = vmatpush1.msra.mxu0 0.0
    %1994 = vmatprep.subr.mxu0 0.0
    %1995 = vmatpush1.msra.mxu0 0.0
    %1996 = vmatprep.subr.mxu0 0.0
    %1997 = vmatpush1.msra.mxu0 0.0
    %1998 = vmatprep.subr.mxu0 0.0
    %1999 = vmatpush1.msra.mxu0 0.0
    %2000 = vmatprep.subr.mxu0 0.0
    %2001 = vmatpush1.msra.mxu0 0.0
    %2002 = vmatprep.subr.mxu0 0.0
    %2003 = vmatpush1.msra.mxu0 0.0
    %2004 = vmatprep.subr.mxu0 0.0
    %2005 = vmatpush1.msra.mxu0 0.0
    %2006 = vmatprep.mubr.f32.mxu0 0.0
    %2007 = vmatmul.mubr.f32.gmra.mrb[0].mxu0 %v1937
    %v2008 = vpop.f32.mrb[0].mxu0
    %v2009 = vadd.f32 %v1934, %v2008
    %v2010 = vpop.f32.mrb[0].mxu0
    %2011 = vmatprep.mubr.f32.mxu0 0.0
    %2012 = vmatmul.mubr.f32.gmra.mrb[0].mxu0 %v1940
    %v2013 = vpop.f32.mrb[0].mxu0
    %v2014 = vadd.f32 %v1934, %v2013
    %v2015 = vpop.f32.mrb[0].mxu0
    %2016 = vdwg.mxu0
    %v2017 = vadd.f32 %v2009, %v1376
    %v2018 = vadd.f32 %v2014, %v1377
    %v2019 = vmul.f32 %v2017, %v1140
    %v2020 = vmul.f32 %v2018, %v1144
    %v2021 = vsel %vm514, %v2019, 0.0
    %2022 = vadd.xlane.f32.xlu0 %v2021
    %v2023 = vpop.xlane.xlu0 %2022
    %v2024 = vsel %vm514, %v2020, 0.0
    %2025 = vadd.xlane.f32.xlu0 %v2024
    %v2026 = vpop.xlane.xlu0 %2025
    %v2027 = vmul.f32 %v2023, %v521
    %v2028 = vmul.f32 %v2026, %v521
    %v2029 = vsub.f32 %v2019, %v2027
    %v2030 = vsub.f32 %v2020, %v2028
    %v2031 = vmul.f32 %v2029, %v2029
    %v2032 = vmul.f32 %v2030, %v2030
    %v2033 = vsel %vm514, %v2031, 0.0
    %2034 = vadd.xlane.f32.xlu0 %v2033
    %v2035 = vpop.xlane.xlu0 %2034
    %v2036 = vsel %vm514, %v2032, 0.0
    %2037 = vadd.xlane.f32.xlu0 %v2036
    %v2038 = vpop.xlane.xlu0 %2037
    %v2039 = vmul.f32 %v2035, %v521
    %v2040 = vmul.f32 %v2038, %v521
    %v2041 = vadd.f32 %v2039, 1e-05
    %v2042 = vadd.f32 %v2040, 1e-05
    %v2043 = vrsqrt.pop %v2041
    %v2044 = vrsqrt.pop %v2042
    %v2045 = vmul.f32 %v2029, %v2043
    %v2046 = vmul.f32 %v2030, %v2044
    %v2047 = vlaneseq
    %v2048 = vshrl.u32 %v2047, 7
    %v2049 = vsub.s32 0, %v2048
    %v2050 = vrot.slane %v1396, %v2049
    %v2051 = vmul.f32 %v2045, %v2050
    %v2052 = vmul.f32 %v2046, %v2050
    %2054 = vrot.lane.b32.xlu0 %v2050, 96
    %v2055 = vpop.permute.xlu0 %2054
    %v2057 = vadd.f32 %v2051, %v2055
    %v2058 = vadd.f32 %v2052, %v2055
    %v2059 = vlaneseq
    %v2060 = vshrl.u32 %v2059, 7
    %v2061 = vsub.s32 0, %v2060
    %v2062 = vrot.slane %v1397, %v2061
    %2067 = vrot.lane.b32.xlu0 %v1383, 96
    %v2068 = vpop.permute.xlu0 %2067
    %2069 = vrot.lane.b32.xlu0 %v1384, 96
    %v2070 = vpop.permute.xlu0 %2069
    %2071 = vrot.lane.b32.xlu0 %v1385, 96
    %v2072 = vpop.permute.xlu0 %2071
    %2073 = vrot.lane.b32.xlu0 %v1386, 96
    %v2074 = vpop.permute.xlu0 %2073
    %v2080 = vsel %vm514, %v2057, 0
    %v2083 = vsel %vm514, %v2058, 0
    %2085 = vmatprep.subr.mxu0 0.0
    %2086 = vmatpush1.msra.mxu0 %v2068
    %2087 = vmatprep.subr.mxu0 0.0
    %2088 = vmatpush1.msra.mxu0 %v2070
    %2089 = vmatprep.subr.mxu0 0.0
    %2090 = vmatpush1.msra.mxu0 %v2072
    %2091 = vmatprep.subr.mxu0 0.0
    %2092 = vmatpush1.msra.mxu0 %v2074
    %2093 = vmatprep.subr.mxu0 0.0
    %2094 = vmatpush1.msra.mxu0 0.0
    %2095 = vmatprep.subr.mxu0 0.0
    %2096 = vmatpush1.msra.mxu0 0.0
    %2097 = vmatprep.subr.mxu0 0.0
    %2098 = vmatpush1.msra.mxu0 0.0
    %2099 = vmatprep.subr.mxu0 0.0
    %2100 = vmatpush1.msra.mxu0 0.0
    %2101 = vmatprep.subr.mxu0 0.0
    %2102 = vmatpush1.msra.mxu0 0.0
    %2103 = vmatprep.subr.mxu0 0.0
    %2104 = vmatpush1.msra.mxu0 0.0
    %2105 = vmatprep.subr.mxu0 0.0
    %2106 = vmatpush1.msra.mxu0 0.0
    %2107 = vmatprep.subr.mxu0 0.0
    %2108 = vmatpush1.msra.mxu0 0.0
    %2109 = vmatprep.subr.mxu0 0.0
    %2110 = vmatpush1.msra.mxu0 0.0
    %2111 = vmatprep.subr.mxu0 0.0
    %2112 = vmatpush1.msra.mxu0 0.0
    %2113 = vmatprep.subr.mxu0 0.0
    %2114 = vmatpush1.msra.mxu0 0.0
    %2115 = vmatprep.subr.mxu0 0.0
    %2116 = vmatpush1.msra.mxu0 0.0
    %2117 = vmatprep.subr.mxu0 0.0
    %2118 = vmatpush1.msra.mxu0 0.0
    %2119 = vmatprep.subr.mxu0 0.0
    %2120 = vmatpush1.msra.mxu0 0.0
    %2121 = vmatprep.subr.mxu0 0.0
    %2122 = vmatpush1.msra.mxu0 0.0
    %2123 = vmatprep.subr.mxu0 0.0
    %2124 = vmatpush1.msra.mxu0 0.0
    %2125 = vmatprep.subr.mxu0 0.0
    %2126 = vmatpush1.msra.mxu0 0.0
    %2127 = vmatprep.subr.mxu0 0.0
    %2128 = vmatpush1.msra.mxu0 0.0
    %2129 = vmatprep.subr.mxu0 0.0
    %2130 = vmatpush1.msra.mxu0 0.0
    %2131 = vmatprep.subr.mxu0 0.0
    %2132 = vmatpush1.msra.mxu0 0.0
    %2133 = vmatprep.subr.mxu0 0.0
    %2134 = vmatpush1.msra.mxu0 0.0
    %2135 = vmatprep.subr.mxu0 0.0
    %2136 = vmatpush1.msra.mxu0 0.0
    %2137 = vmatprep.subr.mxu0 0.0
    %2138 = vmatpush1.msra.mxu0 0.0
    %2139 = vmatprep.subr.mxu0 0.0
    %2140 = vmatpush1.msra.mxu0 0.0
    %2141 = vmatprep.subr.mxu0 0.0
    %2142 = vmatpush1.msra.mxu0 0.0
    %2143 = vmatprep.subr.mxu0 0.0
    %2144 = vmatpush1.msra.mxu0 0.0
    %2145 = vmatprep.subr.mxu0 0.0
    %2146 = vmatpush1.msra.mxu0 0.0
    %2147 = vmatprep.subr.mxu0 0.0
    %2148 = vmatpush1.msra.mxu0 0.0
    %2149 = vmatprep.mubr.f32.mxu0 0.0
    %2150 = vmatmul.mubr.f32.gmra.mrb[0].mxu0 %v2080
    %v2151 = vpop.f32.mrb[0].mxu0
    %v2152 = vadd.f32 %v2062, %v2151
    %v2153 = vpop.f32.mrb[0].mxu0
    %2154 = vmatprep.mubr.f32.mxu0 0.0
    %2155 = vmatmul.mubr.f32.gmra.mrb[0].mxu0 %v2083
    %v2156 = vpop.f32.mrb[0].mxu0
    %v2157 = vadd.f32 %v2062, %v2156
    %v2158 = vpop.f32.mrb[0].mxu0
    %2159 = vdwg.mxu0
    %v2160 = vmax.f32 %v2152, 0.0
    %v2161 = vmax.f32 %v2157, 0.0
    %2162 = vrot.lane.b32.xlu0 %v2050, 64
    %v2163 = vpop.permute.xlu0 %2162
    %v2166 = vsel %vm1292, %v2160, 0
    %v2169 = vsel %vm1292, %v2161, 0
    %2171 = vmatprep.subr.mxu0 0.0
    %2172 = vmatpush1.msra.mxu0 %v1387
    %2173 = vmatprep.subr.mxu0 0.0
    %2174 = vmatpush1.msra.mxu0 %v1388
    %2175 = vmatprep.subr.mxu0 0.0
    %2176 = vmatpush1.msra.mxu0 %v1389
    %2177 = vmatprep.subr.mxu0 0.0
    %2178 = vmatpush1.msra.mxu0 %v1390
    %2179 = vmatprep.subr.mxu0 0.0
    %2180 = vmatpush1.msra.mxu0 %v1391
    %2181 = vmatprep.subr.mxu0 0.0
    %2182 = vmatpush1.msra.mxu0 %v1392
    %2183 = vmatprep.subr.mxu0 0.0
    %2184 = vmatpush1.msra.mxu0 %v1393
    %2185 = vmatprep.subr.mxu0 0.0
    %2186 = vmatpush1.msra.mxu0 %v1394
    %2187 = vmatprep.subr.mxu0 0.0
    %2188 = vmatpush1.msra.mxu0 0.0
    %2189 = vmatprep.subr.mxu0 0.0
    %2190 = vmatpush1.msra.mxu0 0.0
    %2191 = vmatprep.subr.mxu0 0.0
    %2192 = vmatpush1.msra.mxu0 0.0
    %2193 = vmatprep.subr.mxu0 0.0
    %2194 = vmatpush1.msra.mxu0 0.0
    %2195 = vmatprep.subr.mxu0 0.0
    %2196 = vmatpush1.msra.mxu0 0.0
    %2197 = vmatprep.subr.mxu0 0.0
    %2198 = vmatpush1.msra.mxu0 0.0
    %2199 = vmatprep.subr.mxu0 0.0
    %2200 = vmatpush1.msra.mxu0 0.0
    %2201 = vmatprep.subr.mxu0 0.0
    %2202 = vmatpush1.msra.mxu0 0.0
    %2203 = vmatprep.subr.mxu0 0.0
    %2204 = vmatpush1.msra.mxu0 0.0
    %2205 = vmatprep.subr.mxu0 0.0
    %2206 = vmatpush1.msra.mxu0 0.0
    %2207 = vmatprep.subr.mxu0 0.0
    %2208 = vmatpush1.msra.mxu0 0.0
    %2209 = vmatprep.subr.mxu0 0.0
    %2210 = vmatpush1.msra.mxu0 0.0
    %2211 = vmatprep.subr.mxu0 0.0
    %2212 = vmatpush1.msra.mxu0 0.0
    %2213 = vmatprep.subr.mxu0 0.0
    %2214 = vmatpush1.msra.mxu0 0.0
    %2215 = vmatprep.subr.mxu0 0.0
    %2216 = vmatpush1.msra.mxu0 0.0
    %2217 = vmatprep.subr.mxu0 0.0
    %2218 = vmatpush1.msra.mxu0 0.0
    %2219 = vmatprep.subr.mxu0 0.0
    %2220 = vmatpush1.msra.mxu0 0.0
    %2221 = vmatprep.subr.mxu0 0.0
    %2222 = vmatpush1.msra.mxu0 0.0
    %2223 = vmatprep.subr.mxu0 0.0
    %2224 = vmatpush1.msra.mxu0 0.0
    %2225 = vmatprep.subr.mxu0 0.0
    %2226 = vmatpush1.msra.mxu0 0.0
    %2227 = vmatprep.subr.mxu0 0.0
    %2228 = vmatpush1.msra.mxu0 0.0
    %2229 = vmatprep.subr.mxu0 0.0
    %2230 = vmatpush1.msra.mxu0 0.0
    %2231 = vmatprep.subr.mxu0 0.0
    %2232 = vmatpush1.msra.mxu0 0.0
    %2233 = vmatprep.subr.mxu0 0.0
    %2234 = vmatpush1.msra.mxu0 0.0
    %2235 = vmatprep.mubr.f32.mxu0 0.0
    %2236 = vmatmul.mubr.f32.gmra.mrb[0].mxu0 %v2166
    %v2237 = vpop.f32.mrb[0].mxu0
    %v2238 = vadd.f32 %v2163, %v2237
    %v2239 = vpop.f32.mrb[0].mxu0
    %2240 = vmatprep.mubr.f32.mxu0 0.0
    %2241 = vmatmul.mubr.f32.gmra.mrb[0].mxu0 %v2169
    %v2242 = vpop.f32.mrb[0].mxu0
    %v2243 = vadd.f32 %v2163, %v2242
    %v2244 = vpop.f32.mrb[0].mxu0
    %2245 = vdwg.mxu0
    %v2246 = vadd.f32 %v2019, %v2238
    %v2247 = vadd.f32 %v2020, %v2243
    %v2248 = vmul.f32 %v2246, %v1140
    %v2249 = vmul.f32 %v2247, %v1144
    %2250 = vst.msk [vmem:[#allocation2] sm:$0xff] %vm514, %v2248
    %2251 = vst.msk [vmem:[#allocation2 + $0x8] sm:$0xff] %vm514, %v2249
    // Predicated region
    $region14: #{encoder_forward.1} parent=1 // pred_check
      _
    $region15: #{encoder_forward.1} parent=1 // pred_check_branch
      %2253 = sbr.rel (0) target = $region17
    $region16: #{encoder_forward.1} parent=1 // pred_region
      %s2255 = ssub.s32 256, 256
      %2256 = vsyncadd [#allocation3], %s2255
      %s2257 = sshll.u32 [#allocation2], 4
      %s2258 = int_to_ptr.vmem [resolvable:$true] %s2257
      %2263 = dma.vmem_to_hbm [thread:$0]  %s2258, 256, %s3, [#allocation3], 128, 128, 8
    $region17: #{encoder_forward.1} parent=1 // pred_fallthru
      _
    // Predicated region
    $region18: #{encoder_forward.1} parent=1 // pred_check
      _
    $region19: #{encoder_forward.1} parent=1 // pred_check_branch
      %2265 = sbr.rel (0) target = $region21
    $region20: #{encoder_forward.1} parent=1 // pred_region
      %2266 = dma.done [#allocation3], 256
    $region21: #{encoder_forward.1} parent=1 // pred_fallthru
      _
    %2267 = vsyncpa [#allocation3], 1

</llo_original>
